<compile_context>
chip_gen: v6e
topology: v6e:2x2x1
jax: 0.10.0
libtpu: 0.0.40
codegen_flags: <defaults>
</compile_context>

<pallas_src>
import numpy as np
import jax
import jax.numpy as jnp
from jax.experimental import pallas as pl
from jax.experimental.pallas import tpu as pltpu

P_GEM = 3.0
EPS = 1e-6
HALF = 64          # att lanes [0, HALF), cla lanes [HALF, 2*HALF) in the packed matmul


def _make_head_kernel(pool_k, Tp, half):
    def kernel(x_ref, w1t_ref, b1_ref, wac_ref, bac_ref, o_ref, xcube_ref):
        # x_ref block: (BB, F, T, C) channels-last, native backbone dtype (bf16).
        BB, F, T, C = x_ref.shape
        lanes = o_ref.shape[1]                          # 2 * half = 128
        M = BB * Tp

        # 1) Mean over freq (f32 accumulation). Contiguous slice reads, no
        #    transposes; live set is bounded at ~2 (BB,T,C) slabs.
        acc = x_ref[:, 0, :, :].astype(jnp.float32)
        for f in range(1, F):
            acc = acc + x_ref[:, f, :, :].astype(jnp.float32)
        xm = jnp.maximum(acc * (1.0 / F), EPS)          # clamp(min=eps)
        xcube_ref[...] = xm * xm * xm                   # (BB, T, C), ^3

        # 2) GeM: non-overlapping window mean over time as pool_k strided
        #    reads + VPU adds (replaces the old block-diagonal pool matmul).
        #    Trailing frames beyond Tp*pool_k are dropped (matches avg_pool1d).
        g = xcube_ref[:, pl.ds(0, Tp, stride=pool_k), :]
        for j in range(1, pool_k):
            g = g + xcube_ref[:, pl.ds(j, Tp, stride=pool_k), :]
        g = g * (1.0 / pool_k)
        g = jnp.exp(jnp.log(g) * (1.0 / P_GEM))         # cube root; g > 0 guaranteed

        # 3) dropout (eval) -> identity.  fc1 + ReLU, batch folded into the
        #    matmul M dimension; bf16 operands, f32 accumulation.
        g2 = g.reshape(M, C).astype(jnp.bfloat16)
        h = jnp.dot(g2, w1t_ref[...], preferred_element_type=jnp.float32) + b1_ref[...]
        h = jnp.maximum(h, 0.0)                         # (M, C) f32

        # 4) att + cla 1x1 convs packed into one 128-lane matmul:
        #    att logits in lanes [0, half), cla logits in lanes [half, 2*half).
        ac = jnp.dot(h.astype(jnp.bfloat16), wac_ref[...],
                     preferred_element_type=jnp.float32) + bac_ref[...]
        ac = ac.reshape(BB, Tp, lanes)                  # (BB, Tp, 128)

        # 5) softmax over time of tanh(att).  tanh/softmax run over all 128
        #    lanes; only the att lanes are consumed below.
        t = jnp.tanh(ac)
        mx = jnp.max(t, axis=1, keepdims=True)
        e = jnp.exp(t - mx)
        norm_att = e / jnp.sum(e, axis=1, keepdims=True)

        # 6) one lane rotate aligns cla (lane half+i) with norm_att (lane i);
        #    attention-weighted sum over time.  Padded att/cla lanes have zero
        #    weights & bias, so output lanes [nc, half) are exactly 0; lanes
        #    >= half are junk and sliced away by the wrapper.
        cla = pltpu.roll(ac, shift=half, axis=2)
        o_ref[...] = jnp.sum(norm_att * cla, axis=1)    # (BB, 128), lane-dense store

    return kernel


def _padded_elem_bytes(F, T, C, dtype):
    """VMEM bytes of ONE batch element of the (BB, F, T, C) block after
    (sublane, lane) tile padding (bf16 packs 2 rows/sublane -> 16-row tiles)."""
    itemsize = jnp.dtype(dtype).itemsize
    sub = 8 * (4 // itemsize)               # f32: 8, bf16: 16, int8/fp8: 32
    t_pad = -(-T // sub) * sub
    c_pad = -(-C // 128) * 128
    return F * t_pad * c_pad * itemsize


def _pick_block_b(B, Tp, padded_elem_bytes, vmem_budget=24 * 1024 * 1024,
                  m_target=256):
    """Per-step batch block BB: divides B, keeps the (BB, 128) output block
    legal (BB % 8 == 0 or BB == B), budgets the tile-padded, double-buffered
    input block against ~24 MiB (v7x-safe: 64 MiB physical / 32 MiB scoped),
    prefers >= 2 grid steps (v7x has 2 TensorCores) and then BB*Tp >= 256 rows
    so fc1 / att+cla fill a 256-wide MXU (v6e/v7x)."""
    legal = [bb for bb in range(1, B + 1)
             if B % bb == 0 and (bb % 8 == 0 or bb == B)]
    cap = max(1, vmem_budget // max(1, 2 * padded_elem_bytes))   # double-buffered input
    fit = [bb for bb in legal if bb <= cap] or [min(legal)]
    multi = [bb for bb in fit if B // bb >= 2]                   # keep both v7x TCs busy
    cand = multi or fit
    big = [bb for bb in cand if bb * Tp >= m_target]
    return min(big) if big else max(cand)


def attention_g2net_head(feat_bftc, params, pool_k=3, block_b=None):
    """AttentionG2Net head on a channels-last backbone feature map (B, F, T, C).

    The feature map is consumed in its native dtype (e.g. bf16) with C on the
    128-lane axis; everything downstream of the backbone runs in one Pallas
    kernel, `block_b` batch elements per grid step.
    """
    B, F, T, C = feat_bftc.shape
    nc = params["b_att"].shape[0]
    Tp = T // pool_k
    assert Tp >= 1, "time axis shorter than the GeM pooling kernel"
    LANES = 2 * HALF
    # TODO(synk): for num_classes > 64 fall back to a 2x128-lane att/cla layout.
    assert nc <= HALF, "packed att/cla layout requires num_classes <= 64"

    if block_b is None:
        block_b = _pick_block_b(B, Tp, _padded_elem_bytes(F, T, C, feat_bftc.dtype))
    BB = block_b
    assert B % BB == 0 and (BB % 8 == 0 or BB == B), (B, BB)

    # bf16 weights (MXU-native), f32 biases (added to the f32 accumulator).
    w1t = jnp.asarray(params["w_fc1"]).T.astype(jnp.bfloat16)          # (C, C): y = x@W^T
    b1 = jnp.asarray(params["b_fc1"]).reshape(1, C).astype(jnp.float32)

    # Packed att/cla weights: one (C, 128) operand, att in lanes [0,nc),
    # cla in lanes [HALF, HALF+nc); zero elsewhere.
    w_ac = jnp.zeros((C, LANES), jnp.float32)
    w_ac = w_ac.at[:, :nc].set(jnp.asarray(params["w_att"]).T.astype(jnp.float32))
    w_ac = w_ac.at[:, HALF:HALF + nc].set(jnp.asarray(params["w_cla"]).T.astype(jnp.float32))
    w_ac = w_ac.astype(jnp.bfloat16)
    b_ac = jnp.zeros((1, LANES), jnp.float32)
    b_ac = b_ac.at[0, :nc].set(jnp.asarray(params["b_att"]).astype(jnp.float32))
    b_ac = b_ac.at[0, HALF:HALF + nc].set(jnp.asarray(params["b_cla"]).astype(jnp.float32))

    kernel = _make_head_kernel(pool_k, Tp, HALF)
    out = pl.pallas_call(
        kernel,
        out_shape=jax.ShapeDtypeStruct((B, LANES), jnp.float32),
        grid_spec=pltpu.PrefetchScalarGridSpec(
            num_scalar_prefetch=0,
            grid=(B // BB,),
            in_specs=[
                # Lane-dense input block: (T, C) minor dims, C on the 128-lane axis.
                pl.BlockSpec((BB, F, T, C), lambda b: (b, 0, 0, 0)),
                # Constant-index weights stay resident across grid steps.  (On
                # v7x they could also be single-buffered via
                # pipeline_mode=pl.Buffered(1); footprint is ~130 KiB at this C.)
                pl.BlockSpec((C, C), lambda b: (0, 0)),
                pl.BlockSpec((1, C), lambda b: (0, 0)),
                pl.BlockSpec((C, LANES), lambda b: (0, 0)),
                pl.BlockSpec((1, LANES), lambda b: (0, 0)),
            ],
            out_specs=pl.BlockSpec((BB, LANES), lambda b: (b, 0)),     # lane-dense output
            scratch_shapes=[pltpu.VMEM((BB, T, C), jnp.float32)],      # cubed activations
        ),
        compiler_params=pltpu.CompilerParams(
            dimension_semantics=("parallel",),
            vmem_limit_bytes=32 * 1024 * 1024,
        ),
    )(feat_bftc, w1t, b1, w_ac, b_ac)
    return out[:, :nc]


def ref_forward(feat_bftc, params, pool_k=3):
    """Pure-JAX (f32) reference mirroring the PyTorch forward (eval mode)."""
    x = jnp.mean(feat_bftc.astype(jnp.float32), axis=1)            # (B, T, C), freq mean
    x = jnp.transpose(x, (0, 2, 1))                                # (B, C, T)
    x = jnp.maximum(x, EPS) ** P_GEM
    B, C, T = x.shape
    Tp = T // pool_k
    x = x[:, :, : Tp * pool_k].reshape(B, C, Tp, pool_k).mean(-1) ** (1.0 / P_GEM)
    xt = jnp.transpose(x, (0, 2, 1))                               # (B, Tp, C)
    h = jax.nn.relu(xt @ params["w_fc1"].T + params["b_fc1"])
    h = jnp.transpose(h, (0, 2, 1))                                # (B, C, Tp)
    att = jnp.einsum("oc,bct->bot", params["w_att"], h) + params["b_att"][None, :, None]
    norm_att = jax.nn.softmax(jnp.tanh(att), axis=-1)
    cla = jnp.einsum("oc,bct->bot", params["w_cla"], h) + params["b_cla"][None, :, None]
    return jnp.sum(norm_att * cla, axis=2)                         # (B, nc)


if __name__ == "__main__":
    B, C, F, T = 32, 128, 8, 24       # C = in_features; (F, T) = backbone spatial dims
    nc = 1                            # num_classes
    pool_k = 3                        # pooling_kernel_size -> Tp = 8

    key = jax.random.PRNGKey(0)
    k1, k2, k3, k4, k5, k6, k7 = jax.random.split(key, 7)
    # Stand-in backbone output, channels-last (NHWC, as a TPU backbone emits
    # natively) and bf16 -- no wrapper-side transpose / cast HBM pass.
    feat = jax.random.normal(k1, (B, F, T, C), jnp.float32).astype(jnp.bfloat16)

    scale = 1.0 / np.sqrt(C)
    params = {
        "w_fc1": jax.random.normal(k2, (C, C), jnp.float32) * scale,
        "b_fc1": jax.random.normal(k3, (C,), jnp.float32) * 0.1,
        "w_att": jax.random.normal(k4, (nc, C), jnp.float32) * scale,  # conv1d (nc,C,1) squeezed
        "b_att": jax.random.normal(k5, (nc,), jnp.float32) * 0.1,
        "w_cla": jax.random.normal(k6, (nc, C), jnp.float32) * scale,
        "b_cla": jax.random.normal(k7, (nc,), jnp.float32) * 0.1,
    }

    out = jax.block_until_ready(attention_g2net_head(feat, params, pool_k))
    ref = jax.block_until_ready(ref_forward(feat, params, pool_k))
    assert out.shape == (B, nc), out.shape
    # bf16 matmul operands (f32 accumulate) vs the all-f32 reference -> loose tol.
    assert np.allclose(np.asarray(out), np.asarray(ref), rtol=2e-2, atol=2e-2), (
        np.max(np.abs(np.asarray(out) - np.asarray(ref))))
    print("KERNEL_OK")
</pallas_src>

<mosaic_0001>
module attributes {stable_mosaic.version = 11 : i64} {
  func.func @kernel(%arg0: i32, %arg1: memref<16x8x24x128xbf16, #tpu.memory_space<vmem>>, %arg2: memref<128x128xbf16, #tpu.memory_space<vmem>>, %arg3: memref<1x128xf32, #tpu.memory_space<vmem>>, %arg4: memref<128x128xbf16, #tpu.memory_space<vmem>>, %arg5: memref<1x128xf32, #tpu.memory_space<vmem>>, %arg6: memref<16x128xf32, #tpu.memory_space<vmem>>, %arg7: memref<16x24x128xf32, #tpu.memory_space<vmem>>) attributes {dimension_semantics = [#tpu.dimension_semantics<parallel>], iteration_bounds = array<i64: 2>, scalar_prefetch = 0 : i64, scratch_operands = 1 : i64, tpu.core_type = #tpu.core_type<tc>, window_params = [{transform_indices = @transform_0, window_bounds = array<i64: 16, 8, 24, 128>}, {pipeline_mode = #tpu.pipeline_mode<synchronous>, transform_indices = @transform_1, window_bounds = array<i64: 128, 128>}, {pipeline_mode = #tpu.pipeline_mode<synchronous>, transform_indices = @transform_2, window_bounds = array<i64: 1, 128>}, {pipeline_mode = #tpu.pipeline_mode<synchronous>, transform_indices = @transform_3, window_bounds = array<i64: 128, 128>}, {pipeline_mode = #tpu.pipeline_mode<synchronous>, transform_indices = @transform_4, window_bounds = array<i64: 1, 128>}, {transform_indices = @transform_5, window_bounds = array<i64: 16, 128>}]} {
    %c0 = arith.constant 0 : index
    %c0_0 = arith.constant 0 : index
    %c0_1 = arith.constant 0 : index
    %c0_2 = arith.constant 0 : index
    %0 = vector.load %arg1[%c0, %c0_0, %c0_1, %c0_2] : memref<16x8x24x128xbf16, #tpu.memory_space<vmem>>, vector<16x1x24x128xbf16>
    %1 = vector.shape_cast %0 : vector<16x1x24x128xbf16> to vector<16x24x128xbf16>
    %2 = arith.extf %1 : vector<16x24x128xbf16> to vector<16x24x128xf32>
    %c0_3 = arith.constant 0 : index
    %c1 = arith.constant 1 : index
    %c0_4 = arith.constant 0 : index
    %c0_5 = arith.constant 0 : index
    %3 = vector.load %arg1[%c0_3, %c1, %c0_4, %c0_5] : memref<16x8x24x128xbf16, #tpu.memory_space<vmem>>, vector<16x1x24x128xbf16>
    %4 = vector.shape_cast %3 : vector<16x1x24x128xbf16> to vector<16x24x128xbf16>
    %5 = arith.extf %4 : vector<16x24x128xbf16> to vector<16x24x128xf32>
    %6 = arith.addf %2, %5 : vector<16x24x128xf32>
    %c0_6 = arith.constant 0 : index
    %c2 = arith.constant 2 : index
    %c0_7 = arith.constant 0 : index
    %c0_8 = arith.constant 0 : index
    %7 = vector.load %arg1[%c0_6, %c2, %c0_7, %c0_8] : memref<16x8x24x128xbf16, #tpu.memory_space<vmem>>, vector<16x1x24x128xbf16>
    %8 = vector.shape_cast %7 : vector<16x1x24x128xbf16> to vector<16x24x128xbf16>
    %9 = arith.extf %8 : vector<16x24x128xbf16> to vector<16x24x128xf32>
    %10 = arith.addf %6, %9 : vector<16x24x128xf32>
    %c0_9 = arith.constant 0 : index
    %c3 = arith.constant 3 : index
    %c0_10 = arith.constant 0 : index
    %c0_11 = arith.constant 0 : index
    %11 = vector.load %arg1[%c0_9, %c3, %c0_10, %c0_11] : memref<16x8x24x128xbf16, #tpu.memory_space<vmem>>, vector<16x1x24x128xbf16>
    %12 = vector.shape_cast %11 : vector<16x1x24x128xbf16> to vector<16x24x128xbf16>
    %13 = arith.extf %12 : vector<16x24x128xbf16> to vector<16x24x128xf32>
    %14 = arith.addf %10, %13 : vector<16x24x128xf32>
    %c0_12 = arith.constant 0 : index
    %c4 = arith.constant 4 : index
    %c0_13 = arith.constant 0 : index
    %c0_14 = arith.constant 0 : index
    %15 = vector.load %arg1[%c0_12, %c4, %c0_13, %c0_14] : memref<16x8x24x128xbf16, #tpu.memory_space<vmem>>, vector<16x1x24x128xbf16>
    %16 = vector.shape_cast %15 : vector<16x1x24x128xbf16> to vector<16x24x128xbf16>
    %17 = arith.extf %16 : vector<16x24x128xbf16> to vector<16x24x128xf32>
    %18 = arith.addf %14, %17 : vector<16x24x128xf32>
    %c0_15 = arith.constant 0 : index
    %c5 = arith.constant 5 : index
    %c0_16 = arith.constant 0 : index
    %c0_17 = arith.constant 0 : index
    %19 = vector.load %arg1[%c0_15, %c5, %c0_16, %c0_17] : memref<16x8x24x128xbf16, #tpu.memory_space<vmem>>, vector<16x1x24x128xbf16>
    %20 = vector.shape_cast %19 : vector<16x1x24x128xbf16> to vector<16x24x128xbf16>
    %21 = arith.extf %20 : vector<16x24x128xbf16> to vector<16x24x128xf32>
    %22 = arith.addf %18, %21 : vector<16x24x128xf32>
    %c0_18 = arith.constant 0 : index
    %c6 = arith.constant 6 : index
    %c0_19 = arith.constant 0 : index
    %c0_20 = arith.constant 0 : index
    %23 = vector.load %arg1[%c0_18, %c6, %c0_19, %c0_20] : memref<16x8x24x128xbf16, #tpu.memory_space<vmem>>, vector<16x1x24x128xbf16>
    %24 = vector.shape_cast %23 : vector<16x1x24x128xbf16> to vector<16x24x128xbf16>
    %25 = arith.extf %24 : vector<16x24x128xbf16> to vector<16x24x128xf32>
    %26 = arith.addf %22, %25 : vector<16x24x128xf32>
    %c0_21 = arith.constant 0 : index
    %c7 = arith.constant 7 : index
    %c0_22 = arith.constant 0 : index
    %c0_23 = arith.constant 0 : index
    %27 = vector.load %arg1[%c0_21, %c7, %c0_22, %c0_23] : memref<16x8x24x128xbf16, #tpu.memory_space<vmem>>, vector<16x1x24x128xbf16>
    %28 = vector.shape_cast %27 : vector<16x1x24x128xbf16> to vector<16x24x128xbf16>
    %29 = arith.extf %28 : vector<16x24x128xbf16> to vector<16x24x128xf32>
    %30 = arith.addf %26, %29 : vector<16x24x128xf32>
    %cst = arith.constant 1.250000e-01 : f32
    %31 = vector.broadcast %cst : f32 to vector<16x24x128xf32>
    %32 = arith.mulf %30, %31 : vector<16x24x128xf32>
    %cst_24 = arith.constant 9.99999997E-7 : f32
    %33 = vector.broadcast %cst_24 : f32 to vector<16x24x128xf32>
    %34 = arith.maximumf %32, %33 : vector<16x24x128xf32>
    %35 = arith.mulf %34, %34 : vector<16x24x128xf32>
    %36 = arith.mulf %35, %34 : vector<16x24x128xf32>
    %c0_25 = arith.constant 0 : index
    %c0_26 = arith.constant 0 : index
    %c0_27 = arith.constant 0 : index
    %37 = vector.load %arg7[%c0_25, %c0_26, %c0_27] : memref<16x24x128xf32, #tpu.memory_space<vmem>>, vector<16x24x128xf32>
    tpu.vector_store %arg7[%c0_25, %c0_26, %c0_27], %36 {strides = array<i32>} : memref<16x24x128xf32, #tpu.memory_space<vmem>>, vector<16x24x128xf32>,
    %c0_28 = arith.constant 0 : index
    %c0_29 = arith.constant 0 : index
    %c0_30 = arith.constant 0 : index
    %38 = tpu.strided_load %arg7[%c0_28, %c0_29, %c0_30] {strides = array<i32: 1, 3, 1>} : memref<16x24x128xf32, #tpu.memory_space<vmem>>, vector<16x8x128xf32>
    %c0_31 = arith.constant 0 : index
    %c1_32 = arith.constant 1 : index
    %c0_33 = arith.constant 0 : index
    %39 = tpu.strided_load %arg7[%c0_31, %c1_32, %c0_33] {strides = array<i32: 1, 3, 1>} : memref<16x24x128xf32, #tpu.memory_space<vmem>>, vector<16x8x128xf32>
    %40 = arith.addf %38, %39 : vector<16x8x128xf32>
    %c0_34 = arith.constant 0 : index
    %c2_35 = arith.constant 2 : index
    %c0_36 = arith.constant 0 : index
    %41 = tpu.strided_load %arg7[%c0_34, %c2_35, %c0_36] {strides = array<i32: 1, 3, 1>} : memref<16x24x128xf32, #tpu.memory_space<vmem>>, vector<16x8x128xf32>
    %42 = arith.addf %40, %41 : vector<16x8x128xf32>
    %cst_37 = arith.constant 0.333333343 : f32
    %43 = vector.broadcast %cst_37 : f32 to vector<16x8x128xf32>
    %44 = arith.mulf %42, %43 : vector<16x8x128xf32>
    %45 = math.log %44 : vector<16x8x128xf32>
    %cst_38 = arith.constant 0.333333343 : f32
    %46 = vector.broadcast %cst_38 : f32 to vector<16x8x128xf32>
    %47 = arith.mulf %45, %46 : vector<16x8x128xf32>
    %48 = math.exp %47 : vector<16x8x128xf32>
    %49 = vector.shape_cast %48 : vector<16x8x128xf32> to vector<128x128xf32>
    %50 = arith.truncf %49 : vector<128x128xf32> to vector<128x128xbf16>
    %c0_39 = arith.constant 0 : index
    %c0_40 = arith.constant 0 : index
    %51 = vector.load %arg2[%c0_39, %c0_40] : memref<128x128xbf16, #tpu.memory_space<vmem>>, vector<128x128xbf16>
    %cst_41 = arith.constant dense<0.000000e+00> : vector<128x128xf32>
    %52 = tpu.matmul %50, %51, %cst_41 {dimension_numbers = #tpu.dot_dimension_numbers<[1], [0], [0], [1], [0, 0, 1, 1], [], []>} : vector<128x128xbf16>, vector<128x128xbf16>, vector<128x128xf32> -> vector<128x128xf32>
    %c0_42 = arith.constant 0 : index
    %c0_43 = arith.constant 0 : index
    %53 = vector.load %arg3[%c0_42, %c0_43] : memref<1x128xf32, #tpu.memory_space<vmem>>, vector<1x128xf32>
    %54 = vector.broadcast %53 : vector<1x128xf32> to vector<128x128xf32>
    %55 = arith.addf %52, %54 : vector<128x128xf32>
    %cst_44 = arith.constant 0.000000e+00 : f32
    %56 = vector.broadcast %cst_44 : f32 to vector<128x128xf32>
    %57 = arith.maximumf %55, %56 : vector<128x128xf32>
    %58 = arith.truncf %57 : vector<128x128xf32> to vector<128x128xbf16>
    %c0_45 = arith.constant 0 : index
    %c0_46 = arith.constant 0 : index
    %59 = vector.load %arg4[%c0_45, %c0_46] : memref<128x128xbf16, #tpu.memory_space<vmem>>, vector<128x128xbf16>
    %cst_47 = arith.constant dense<0.000000e+00> : vector<128x128xf32>
    %60 = tpu.matmul %58, %59, %cst_47 {dimension_numbers = #tpu.dot_dimension_numbers<[1], [0], [0], [1], [0, 0, 1, 1], [], []>} : vector<128x128xbf16>, vector<128x128xbf16>, vector<128x128xf32> -> vector<128x128xf32>
    %c0_48 = arith.constant 0 : index
    %c0_49 = arith.constant 0 : index
    %61 = vector.load %arg5[%c0_48, %c0_49] : memref<1x128xf32, #tpu.memory_space<vmem>>, vector<1x128xf32>
    %62 = vector.broadcast %61 : vector<1x128xf32> to vector<128x128xf32>
    %63 = arith.addf %60, %62 : vector<128x128xf32>
    %64 = vector.shape_cast %63 : vector<128x128xf32> to vector<16x8x128xf32>
    %65 = math.tanh %64 : vector<16x8x128xf32>
    %cst_50 = arith.constant dense<0xFF800000> : vector<16x128xf32>
    %66 = vector.multi_reduction <maximumf>, %65, %cst_50 [1] : vector<16x8x128xf32> to vector<16x128xf32>
    %67 = vector.shape_cast %66 : vector<16x128xf32> to vector<16x1x128xf32>
    %68 = vector.broadcast %67 : vector<16x1x128xf32> to vector<16x8x128xf32>
    %69 = arith.subf %65, %68 : vector<16x8x128xf32>
    %70 = math.exp %69 : vector<16x8x128xf32>
    %cst_51 = arith.constant dense<0.000000e+00> : vector<16x128xf32>
    %71 = vector.multi_reduction <add>, %70, %cst_51 [1] : vector<16x8x128xf32> to vector<16x128xf32>
    %72 = vector.shape_cast %71 : vector<16x128xf32> to vector<16x1x128xf32>
    %73 = vector.broadcast %72 : vector<16x1x128xf32> to vector<16x8x128xf32>
    %74 = arith.divf %70, %73 : vector<16x8x128xf32>
    %c64_i32 = arith.constant 64 : i32
    %75 = tpu.dynamic_rotate %64 by %c64_i32 dim 2 : vector<16x8x128xf32>, i32 -> vector<16x8x128xf32>
    %76 = arith.mulf %74, %75 : vector<16x8x128xf32>
    %cst_52 = arith.constant dense<0.000000e+00> : vector<16x128xf32>
    %77 = vector.multi_reduction <add>, %76, %cst_52 [1] : vector<16x8x128xf32> to vector<16x128xf32>
    %c0_53 = arith.constant 0 : index
    %c0_54 = arith.constant 0 : index
    %78 = vector.load %arg6[%c0_53, %c0_54] : memref<16x128xf32, #tpu.memory_space<vmem>>, vector<16x128xf32>
    tpu.vector_store %arg6[%c0_53, %c0_54], %77 {strides = array<i32>} : memref<16x128xf32, #tpu.memory_space<vmem>>, vector<16x128xf32>,
    return
  }
  func.func @transform_0(%arg0: i32) -> (i32, i32, i32, i32) {
    %c0_i32 = arith.constant 0 : i32
    %c0_i32_0 = arith.constant 0 : i32
    %c0_i32_1 = arith.constant 0 : i32
    %c0_i32_2 = arith.constant 0 : i32
    return %arg0, %c0_i32, %c0_i32_0, %c0_i32_1 : i32, i32, i32, i32
  }
  func.func @transform_1(%arg0: i32) -> (i32, i32) {
    %c0_i32 = arith.constant 0 : i32
    %c0_i32_0 = arith.constant 0 : i32
    %c0_i32_1 = arith.constant 0 : i32
    return %c0_i32, %c0_i32_0 : i32, i32
  }
  func.func @transform_2(%arg0: i32) -> (i32, i32) {
    %c0_i32 = arith.constant 0 : i32
    %c0_i32_0 = arith.constant 0 : i32
    %c0_i32_1 = arith.constant 0 : i32
    return %c0_i32, %c0_i32_0 : i32, i32
  }
  func.func @transform_3(%arg0: i32) -> (i32, i32) {
    %c0_i32 = arith.constant 0 : i32
    %c0_i32_0 = arith.constant 0 : i32
    %c0_i32_1 = arith.constant 0 : i32
    return %c0_i32, %c0_i32_0 : i32, i32
  }
  func.func @transform_4(%arg0: i32) -> (i32, i32) {
    %c0_i32 = arith.constant 0 : i32
    %c0_i32_0 = arith.constant 0 : i32
    %c0_i32_1 = arith.constant 0 : i32
    return %c0_i32, %c0_i32_0 : i32, i32
  }
  func.func @transform_5(%arg0: i32) -> (i32, i32) {
    %c0_i32 = arith.constant 0 : i32
    %c0_i32_0 = arith.constant 0 : i32
    return %arg0, %c0_i32 : i32, i32
  }
}

</mosaic_0001>

<llo_original>
// kernel: tpu_custom_call.1
$region0: #{tpu_custom_call.1}
  #allocation0 [shape = 'u32[]', space=smem, size = 0x4, offset = 0x4, fixed_abs, tag = 'smem constant byte address 0x4 - core index']
  #allocation1 [shape = 'u32[144,128]{1,0:T(1,128)}', space=vmem, size = 0x12000, scoped, tag = 'internal scratch']
  #allocation2 [shape = 'f32[16,24,128]{2,1,0:T(8,128)}', space=vmem, size = 0x30000, scoped, tag = 'scratch operand']
  %s0 = inlined_call_operand.hbm [shape: bf16[32,8,24,128], index: 0, kind: input, shape index: {}]
  %s1 = inlined_call_operand.hbm [shape: bf16[128,128], index: 1, kind: input, shape index: {}]
  %s2 = inlined_call_operand.hbm [shape: f32[1,128], index: 2, kind: input, shape index: {}]
  %s3 = inlined_call_operand.hbm [shape: bf16[128,128], index: 3, kind: input, shape index: {}]
  %s4 = inlined_call_operand.hbm [shape: f32[1,128], index: 4, kind: input, shape index: {}]
  %s5 = inlined_call_operand.hbm [shape: f32[32,128], index: 5, kind: output, shape index: {}]
  %s6 = sld [smem:[#allocation0]]
  $region73: #{tpu_custom_call.1} parent=0
    _
  %s8 = ssub.s32 1, %s6
  %s9 = scalar_select 0, %s8, %s6
  $region1: #{tpu_custom_call.1} parent=0
    #allocation3 [shape = 'u8[1572864]{0}', space=vmem, size = 0x180000, scoped, tag = 'input window, operand 0']
    #allocation4 [shape = 's32[2]{0}', space=sflag, size = 0x8, scoped, tag = 'scoped memory for tpu_custom_call.1']
    #allocation5 [shape = 's32[2]{0}', space=sflag, size = 0x8, scoped, tag = 'scoped memory for tpu_custom_call.1']
    #allocation6 [shape = 'u8[32768]{0}', space=vmem, size = 0x8000, scoped, tag = 'input window, operand 1, single buffered']
    #allocation7 [shape = 's32[1]{0}', space=sflag, size = 0x4, scoped, tag = 'scoped memory for tpu_custom_call.1']
    #allocation8 [shape = 'u8[512]{0}', space=vmem, size = 0x400, scoped, tag = 'input window, operand 2, single buffered']
    #allocation9 [shape = 'u8[32768]{0}', space=vmem, size = 0x8000, scoped, tag = 'input window, operand 3, single buffered']
    #allocation10 [shape = 's32[1]{0}', space=sflag, size = 0x4, scoped, tag = 'scoped memory for tpu_custom_call.1']
    #allocation11 [shape = 'u8[512]{0}', space=vmem, size = 0x400, scoped, tag = 'input window, operand 4, single buffered']
    #allocation12 [shape = 'u8[16384]{0}', space=vmem, size = 0x4000, scoped, tag = 'output window, operand 0']
    %10 = vsyncpa [#allocation4], 0
    %s11 = scalar_lea.sflag [#allocation4], 1
    %12 = vsyncpa %s11, 0
    %13 = vsyncpa [#allocation7], 0
    %14 = vsyncpa [#allocation10], 0
    %15 = vsyncpa [#allocation5], 0
    %s16 = scalar_lea.sflag [#allocation5], 1
    %17 = vsyncpa %s16, 0
    loop: start=0, step=1, limit=4
    $region2: #{tpu_custom_call.1} parent=1 // loop_pre_header
      _
    $region3: #{tpu_custom_call.1} parent=1 // loop_header
      %s19 = sphi 0, %s23
      %p20 = scmp.ge.s32.totalorder %s19, 4
      %s29 = sphi 0, %s31
      %s32 = sphi 0, %s29
      %s33 = sphi 0, %s32
      %s49 = sphi 0, %s33
      %s53 = sphi 0, %s53
      %s55 = sphi 0, %s53
      %s56 = sphi 0, %s55
      %s70 = sphi 0, %s56
      %s74 = sphi 0, %s74
      %s76 = sphi 0, %s74
      %s77 = sphi 0, %s76
      %s91 = sphi 0, %s77
      %s95 = sphi 0, %s95
      %s97 = sphi 0, %s95
      %s98 = sphi 0, %s97
      %s112 = sphi 0, %s98
      %s116 = sphi 0, %s116
      %s118 = sphi 0, %s116
      %s119 = sphi 0, %s118
      %s133 = sphi 0, %s119
      %s139 = sphi 0, %s141
      %s142 = sphi 0, %s139
      %s143 = sphi 0, %s142
      %s159 = sphi 0, %s143
    $region4: #{tpu_custom_call.1} parent=1 // loop_header_branch
      %22 = sbr.rel (%p20) target = $region8
    $region5: #{tpu_custom_call.1} parent=1 // loop_body
      %s24 = ssub.s32 %s19, 1
      %s25 = ssub.s32 %s19, 2
      %s26 = sadd.s32 %s19, 1
      %s27 = ssub.s32 %s19, %s26
      %p28 = scmp.eq.s32.totalorder %s27, 0
      %s30 = sadd.s32 %s29, 1
      %s31 = scalar_select %p28, %s29, %s30
      %p34 = pneg %p28
      %p35 = scmp.eq.s32.totalorder %s19, 1
      %p36 = por %p34, %p35
      %p37 = scmp.ne.s32.totalorder %s29, %s32
      %p38 = scmp.eq.s32.totalorder %s19, 0
      %p39 = por %p37, %p38
      %p40 = scmp.ne.s32.totalorder %s29, %s32
      %p41 = scmp.eq.s32.totalorder %s24, 1
      %p42 = por %p40, %p41
      %p43 = scmp.ne.s32.totalorder %s32, %s33
      %p44 = scmp.eq.s32.totalorder %s24, 0
      %p45 = por %p43, %p44
      %p46 = scmp.ne.s32.totalorder %s32, %s33
      %p47 = scmp.eq.s32.totalorder %s25, 1
      %p48 = por %p46, %p47
      %p50 = scmp.ne.s32.totalorder %s33, %s49
      %p51 = scmp.eq.s32.totalorder %s25, 0
      %p52 = por %p50, %p51
      %s54 = sadd.s32 %s53, 1
      %p57 = scmp.eq.s32.totalorder %s19, 1
      %p58 = scmp.ne.s32.totalorder %s53, %s55
      %p59 = scmp.eq.s32.totalorder %s19, 0
      %p60 = por %p58, %p59
      %p61 = scmp.ne.s32.totalorder %s53, %s55
      %p62 = scmp.eq.s32.totalorder %s24, 1
      %p63 = por %p61, %p62
      %p64 = scmp.ne.s32.totalorder %s55, %s56
      %p65 = scmp.eq.s32.totalorder %s24, 0
      %p66 = por %p64, %p65
      %p67 = scmp.ne.s32.totalorder %s55, %s56
      %p68 = scmp.eq.s32.totalorder %s25, 1
      %p69 = por %p67, %p68
      %p71 = scmp.ne.s32.totalorder %s56, %s70
      %p72 = scmp.eq.s32.totalorder %s25, 0
      %p73 = por %p71, %p72
      %s75 = sadd.s32 %s74, 1
      %p78 = scmp.eq.s32.totalorder %s19, 1
      %p79 = scmp.ne.s32.totalorder %s74, %s76
      %p80 = scmp.eq.s32.totalorder %s19, 0
      %p81 = por %p79, %p80
      %p82 = scmp.ne.s32.totalorder %s74, %s76
      %p83 = scmp.eq.s32.totalorder %s24, 1
      %p84 = por %p82, %p83
      %p85 = scmp.ne.s32.totalorder %s76, %s77
      %p86 = scmp.eq.s32.totalorder %s24, 0
      %p87 = por %p85, %p86
      %p88 = scmp.ne.s32.totalorder %s76, %s77
      %p89 = scmp.eq.s32.totalorder %s25, 1
      %p90 = por %p88, %p89
      %p92 = scmp.ne.s32.totalorder %s77, %s91
      %p93 = scmp.eq.s32.totalorder %s25, 0
      %p94 = por %p92, %p93
      %s96 = sadd.s32 %s95, 1
      %p99 = scmp.eq.s32.totalorder %s19, 1
      %p100 = scmp.ne.s32.totalorder %s95, %s97
      %p101 = scmp.eq.s32.totalorder %s19, 0
      %p102 = por %p100, %p101
      %p103 = scmp.ne.s32.totalorder %s95, %s97
      %p104 = scmp.eq.s32.totalorder %s24, 1
      %p105 = por %p103, %p104
      %p106 = scmp.ne.s32.totalorder %s97, %s98
      %p107 = scmp.eq.s32.totalorder %s24, 0
      %p108 = por %p106, %p107
      %p109 = scmp.ne.s32.totalorder %s97, %s98
      %p110 = scmp.eq.s32.totalorder %s25, 1
      %p111 = por %p109, %p110
      %p113 = scmp.ne.s32.totalorder %s98, %s112
      %p114 = scmp.eq.s32.totalorder %s25, 0
      %p115 = por %p113, %p114
      %s117 = sadd.s32 %s116, 1
      %p120 = scmp.eq.s32.totalorder %s19, 1
      %p121 = scmp.ne.s32.totalorder %s116, %s118
      %p122 = scmp.eq.s32.totalorder %s19, 0
      %p123 = por %p121, %p122
      %p124 = scmp.ne.s32.totalorder %s116, %s118
      %p125 = scmp.eq.s32.totalorder %s24, 1
      %p126 = por %p124, %p125
      %p127 = scmp.ne.s32.totalorder %s118, %s119
      %p128 = scmp.eq.s32.totalorder %s24, 0
      %p129 = por %p127, %p128
      %p130 = scmp.ne.s32.totalorder %s118, %s119
      %p131 = scmp.eq.s32.totalorder %s25, 1
      %p132 = por %p130, %p131
      %p134 = scmp.ne.s32.totalorder %s119, %s133
      %p135 = scmp.eq.s32.totalorder %s25, 0
      %p136 = por %p134, %p135
      %s137 = ssub.s32 %s19, %s26
      %p138 = scmp.eq.s32.totalorder %s137, 0
      %s140 = sadd.s32 %s139, 1
      %s141 = scalar_select %p138, %s139, %s140
      %p144 = pneg %p138
      %p145 = scmp.eq.s32.totalorder %s19, 1
      %p146 = por %p144, %p145
      %p147 = scmp.ne.s32.totalorder %s139, %s142
      %p148 = scmp.eq.s32.totalorder %s19, 0
      %p149 = por %p147, %p148
      %p150 = scmp.ne.s32.totalorder %s139, %s142
      %p151 = scmp.eq.s32.totalorder %s24, 1
      %p152 = por %p150, %p151
      %p153 = scmp.ne.s32.totalorder %s142, %s143
      %p154 = scmp.eq.s32.totalorder %s24, 0
      %p155 = por %p153, %p154
      %p156 = scmp.ne.s32.totalorder %s142, %s143
      %p157 = scmp.eq.s32.totalorder %s25, 1
      %p158 = por %p156, %p157
      %p160 = scmp.ne.s32.totalorder %s143, %s159
      %p161 = scmp.eq.s32.totalorder %s25, 0
      %p162 = por %p160, %p161
      %p163 = scmp.le.s32.totalorder 1, %s19
      %p164 = scmp.lt.s32.totalorder %s19, 3
      %p165 = pnand %p163, %p164
      %p166 = pneg %p165
      // Predicated region
      $region9: #{tpu_custom_call.1} parent=5 // pred_check
        _
      $region10: #{tpu_custom_call.1} parent=5 // pred_check_branch
        %168 = sbr.rel (%p165) target = $region12
      $region11: #{tpu_custom_call.1} parent=5 // pred_region
        %s169 = ssub.s32 %s19, 1
        // Predicated region
        $region13: #{tpu_custom_call.1} parent=11 // pred_check
          %p170 = pneg %p66
        $region14: #{tpu_custom_call.1} parent=11 // pred_check_branch
          %172 = sbr.rel (%p170) target = $region16
        $region15: #{tpu_custom_call.1} parent=11 // pred_region
          %s174 = ssub.s32 1024, 1024
          %175 = vsyncadd [#allocation7], %s174
          %s176 = sshll.u32 [#allocation6], 4
          %s177 = int_to_ptr.vmem [resolvable:$true] %s176
          %182 = dma.hbm_to_vmem [thread:$0]  %s1, 1024, %s177, [#allocation7], 64, 64, 4
        $region16: #{tpu_custom_call.1} parent=11 // pred_fallthru
          _
        // Predicated region
        $region17: #{tpu_custom_call.1} parent=11 // pred_check
          %p183 = pneg %p87
        $region18: #{tpu_custom_call.1} parent=11 // pred_check_branch
          %185 = sbr.rel (%p183) target = $region20
        $region19: #{tpu_custom_call.1} parent=11 // pred_region
          %s187 = ssub.s32 16, 16
          %188 = vsyncadd [#allocation7], %s187
          %s190 = sshll.u32 [#allocation8], 4
          %s191 = int_to_ptr.vmem [resolvable:$true] %s190
          %193 = dma.hbm_to_vmem [thread:$0]  %s2, 16, %s191, [#allocation7]
        $region20: #{tpu_custom_call.1} parent=11 // pred_fallthru
          _
        // Predicated region
        $region21: #{tpu_custom_call.1} parent=11 // pred_check
          %p194 = pneg %p108
        $region22: #{tpu_custom_call.1} parent=11 // pred_check_branch
          %196 = sbr.rel (%p194) target = $region24
        $region23: #{tpu_custom_call.1} parent=11 // pred_region
          %s198 = ssub.s32 1024, 1024
          %199 = vsyncadd [#allocation10], %s198
          %s200 = sshll.u32 [#allocation9], 4
          %s201 = int_to_ptr.vmem [resolvable:$true] %s200
          %206 = dma.hbm_to_vmem [thread:$0]  %s3, 1024, %s201, [#allocation10], 64, 64, 4
        $region24: #{tpu_custom_call.1} parent=11 // pred_fallthru
          _
        // Predicated region
        $region25: #{tpu_custom_call.1} parent=11 // pred_check
          %p207 = pneg %p129
        $region26: #{tpu_custom_call.1} parent=11 // pred_check_branch
          %209 = sbr.rel (%p207) target = $region28
        $region27: #{tpu_custom_call.1} parent=11 // pred_region
          %s211 = ssub.s32 16, 16
          %212 = vsyncadd [#allocation10], %s211
          %s214 = sshll.u32 [#allocation11], 4
          %s215 = int_to_ptr.vmem [resolvable:$true] %s214
          %217 = dma.hbm_to_vmem [thread:$0]  %s4, 16, %s215, [#allocation10]
        $region28: #{tpu_custom_call.1} parent=11 // pred_fallthru
          _
      $region12: #{tpu_custom_call.1} parent=5 // pred_fallthru
        _
      %p218 = scmp.lt.s32.totalorder %s19, 2
      // Predicated region
      $region29: #{tpu_custom_call.1} parent=5 // pred_check
        %p219 = pneg %p218
      $region30: #{tpu_custom_call.1} parent=5 // pred_check_branch
        %221 = sbr.rel (%p219) target = $region32
      $region31: #{tpu_custom_call.1} parent=5 // pred_region
        // Predicated region
        $region33: #{tpu_custom_call.1} parent=31 // pred_check
          %p222 = pneg %p39
        $region34: #{tpu_custom_call.1} parent=31 // pred_check_branch
          %224 = sbr.rel (%p222) target = $region36
        $region35: #{tpu_custom_call.1} parent=31 // pred_region
          %s225 = sand.u32 %s29, 1
          %s226 = scalar_lea.sflag [#allocation4], %s225
          %s227 = sand.u32 %s29, 1
          %s228 = smul.addr %s227, 1536
          %s229 = scalar_lea.vmem [#allocation3], %s228
          %s230 = smul.u32 16, %s19
          %s232 = ssub.s32 24576, 24576
          %233 = vsyncadd %s226, %s232
          %s234 = smul.addr %s230, 24
          %s235 = smul.addr %s234, 64
          %s236 = scalar_lea.hbm %s0, %s235
          %s237 = sshll.u32 %s229, 4
          %s238 = int_to_ptr.vmem [resolvable:$true] %s237
          %243 = dma.hbm_to_vmem [thread:$0]  %s236, 24576, %s238, %s226, 64, 64, 4
        $region36: #{tpu_custom_call.1} parent=31 // pred_fallthru
          _
      $region32: #{tpu_custom_call.1} parent=5 // pred_fallthru
        _
      %p244 = scmp.le.s32.totalorder 1, %s19
      %p245 = scmp.lt.s32.totalorder %s19, 3
      %p246 = pnand %p244, %p245
      %p247 = pneg %p246
      // Predicated region
      $region37: #{tpu_custom_call.1} parent=5 // pred_check
        _
      $region38: #{tpu_custom_call.1} parent=5 // pred_check_branch
        %249 = sbr.rel (%p246) target = $region40
      $region39: #{tpu_custom_call.1} parent=5 // pred_region
        %s250 = ssub.s32 %s19, 1
        %s251 = sand.u32 %s32, 1
        %s252 = scalar_lea.sflag [#allocation4], %s251
        %s253 = sand.u32 %s32, 1
        %s254 = smul.addr %s253, 1536
        %s255 = scalar_lea.vmem [#allocation3], %s254
        // Predicated region
        $region41: #{tpu_custom_call.1} parent=39 // pred_check
          %p256 = pneg %p45
        $region42: #{tpu_custom_call.1} parent=39 // pred_check_branch
          %258 = sbr.rel (%p256) target = $region44
        $region43: #{tpu_custom_call.1} parent=39 // pred_region
          %259 = dma.done %s252, 24576
        $region44: #{tpu_custom_call.1} parent=39 // pred_fallthru
          _
        // Predicated region
        $region45: #{tpu_custom_call.1} parent=39 // pred_check
          %p260 = pneg %p66
        $region46: #{tpu_custom_call.1} parent=39 // pred_check_branch
          %262 = sbr.rel (%p260) target = $region48
        $region47: #{tpu_custom_call.1} parent=39 // pred_region
          %263 = dma.done [#allocation7], 1024
        $region48: #{tpu_custom_call.1} parent=39 // pred_fallthru
          _
        // Predicated region
        $region49: #{tpu_custom_call.1} parent=39 // pred_check
          %p264 = pneg %p87
        $region50: #{tpu_custom_call.1} parent=39 // pred_check_branch
          %266 = sbr.rel (%p264) target = $region52
        $region51: #{tpu_custom_call.1} parent=39 // pred_region
          %267 = dma.done [#allocation7], 16
        $region52: #{tpu_custom_call.1} parent=39 // pred_fallthru
          _
        // Predicated region
        $region53: #{tpu_custom_call.1} parent=39 // pred_check
          %p268 = pneg %p108
        $region54: #{tpu_custom_call.1} parent=39 // pred_check_branch
          %270 = sbr.rel (%p268) target = $region56
        $region55: #{tpu_custom_call.1} parent=39 // pred_region
          %271 = dma.done [#allocation10], 1024
        $region56: #{tpu_custom_call.1} parent=39 // pred_fallthru
          _
        // Predicated region
        $region57: #{tpu_custom_call.1} parent=39 // pred_check
          %p272 = pneg %p129
        $region58: #{tpu_custom_call.1} parent=39 // pred_check_branch
          %274 = sbr.rel (%p272) target = $region60
        $region59: #{tpu_custom_call.1} parent=39 // pred_region
          %275 = dma.done [#allocation10], 16
        $region60: #{tpu_custom_call.1} parent=39 // pred_fallthru
          _
        %s276 = sand.u32 %s32, 1
        %s277 = scalar_lea.sflag [#allocation4], %s276
        %s278 = sand.u32 %s32, 1
        %s279 = smul.addr %s278, 1536
        %s280 = scalar_lea.vmem [#allocation3], %s279
        %p281 = pneg %p45
        %p282 = pneg %p42
        %p283 = pneg %p66
        %p284 = pneg %p63
        %p285 = pneg %p87
        %p286 = pneg %p84
        %p287 = pneg %p108
        %p288 = pneg %p105
        %p289 = pneg %p129
        %p290 = pneg %p126
        %p291 = pneg %p155
        %p292 = pneg %p152
        %s293 = sand.u32 %s142, 1
        %s294 = scalar_lea.sflag [#allocation5], %s293
        %s295 = sand.u32 %s142, 1
        %s296 = smul.addr %s295, 16
        %s297 = scalar_lea.vmem [#allocation12], %s296
        %s298 = smul.u32 16, %s24
        %s299 = smul.u32 2, %s24
        %v301 = vld [vmem:[%s255] sm:$0xf]
        %v302 = vld [vmem:[%s255 + $0x4] sm:$0xf]
        %v303 = vld [vmem:[%s255 + $0x8] sm:$0xf]
        %v304 = vld [vmem:[%s255 + $0x60] sm:$0xf]
        %v305 = vld [vmem:[%s255 + $0x64] sm:$0xf]
        %v306 = vld [vmem:[%s255 + $0x68] sm:$0xf]
        %v307 = vld [vmem:[%s255 + $0xc0] sm:$0xf]
        %v308 = vld [vmem:[%s255 + $0xc4] sm:$0xf]
        %v309 = vld [vmem:[%s255 + $0xc8] sm:$0xf]
        %v310 = vld [vmem:[%s255 + $0x120] sm:$0xf]
        %v311 = vld [vmem:[%s255 + $0x124] sm:$0xf]
        %v312 = vld [vmem:[%s255 + $0x128] sm:$0xf]
        %v313 = vld [vmem:[%s255 + $0x180] sm:$0xf]
        %v314 = vld [vmem:[%s255 + $0x184] sm:$0xf]
        %v315 = vld [vmem:[%s255 + $0x188] sm:$0xf]
        %v316 = vld [vmem:[%s255 + $0x1e0] sm:$0xf]
        %v317 = vld [vmem:[%s255 + $0x1e4] sm:$0xf]
        %v318 = vld [vmem:[%s255 + $0x1e8] sm:$0xf]
        %v319 = vld [vmem:[%s255 + $0x240] sm:$0xf]
        %v320 = vld [vmem:[%s255 + $0x244] sm:$0xf]
        %v321 = vld [vmem:[%s255 + $0x248] sm:$0xf]
        %v322 = vld [vmem:[%s255 + $0x2a0] sm:$0xf]
        %v323 = vld [vmem:[%s255 + $0x2a4] sm:$0xf]
        %v324 = vld [vmem:[%s255 + $0x2a8] sm:$0xf]
        %v325 = vld [vmem:[%s255 + $0x300] sm:$0xf]
        %v326 = vld [vmem:[%s255 + $0x304] sm:$0xf]
        %v327 = vld [vmem:[%s255 + $0x308] sm:$0xf]
        %v328 = vld [vmem:[%s255 + $0x360] sm:$0xf]
        %v329 = vld [vmem:[%s255 + $0x364] sm:$0xf]
        %v330 = vld [vmem:[%s255 + $0x368] sm:$0xf]
        %v331 = vld [vmem:[%s255 + $0x3c0] sm:$0xf]
        %v332 = vld [vmem:[%s255 + $0x3c4] sm:$0xf]
        %v333 = vld [vmem:[%s255 + $0x3c8] sm:$0xf]
        %v334 = vld [vmem:[%s255 + $0x420] sm:$0xf]
        %v335 = vld [vmem:[%s255 + $0x424] sm:$0xf]
        %v336 = vld [vmem:[%s255 + $0x428] sm:$0xf]
        %v337 = vld [vmem:[%s255 + $0x480] sm:$0xf]
        %v338 = vld [vmem:[%s255 + $0x484] sm:$0xf]
        %v339 = vld [vmem:[%s255 + $0x488] sm:$0xf]
        %v340 = vld [vmem:[%s255 + $0x4e0] sm:$0xf]
        %v341 = vld [vmem:[%s255 + $0x4e4] sm:$0xf]
        %v342 = vld [vmem:[%s255 + $0x4e8] sm:$0xf]
        %v343 = vld [vmem:[%s255 + $0x540] sm:$0xf]
        %v344 = vld [vmem:[%s255 + $0x544] sm:$0xf]
        %v345 = vld [vmem:[%s255 + $0x548] sm:$0xf]
        %v346 = vld [vmem:[%s255 + $0x5a0] sm:$0xf]
        %v347 = vld [vmem:[%s255 + $0x5a4] sm:$0xf]
        %v348 = vld [vmem:[%s255 + $0x5a8] sm:$0xf]
        %v349 = vunpack.c.l.bf16 %v301
        %v350 = vunpack.c.l.bf16 %v302
        %v351 = vunpack.c.l.bf16 %v303
        %v352 = vunpack.c.l.bf16 %v304
        %v353 = vunpack.c.l.bf16 %v305
        %v354 = vunpack.c.l.bf16 %v306
        %v355 = vunpack.c.l.bf16 %v307
        %v356 = vunpack.c.l.bf16 %v308
        %v357 = vunpack.c.l.bf16 %v309
        %v358 = vunpack.c.l.bf16 %v310
        %v359 = vunpack.c.l.bf16 %v311
        %v360 = vunpack.c.l.bf16 %v312
        %v361 = vunpack.c.l.bf16 %v313
        %v362 = vunpack.c.l.bf16 %v314
        %v363 = vunpack.c.l.bf16 %v315
        %v364 = vunpack.c.l.bf16 %v316
        %v365 = vunpack.c.l.bf16 %v317
        %v366 = vunpack.c.l.bf16 %v318
        %v367 = vunpack.c.l.bf16 %v319
        %v368 = vunpack.c.l.bf16 %v320
        %v369 = vunpack.c.l.bf16 %v321
        %v370 = vunpack.c.l.bf16 %v322
        %v371 = vunpack.c.l.bf16 %v323
        %v372 = vunpack.c.l.bf16 %v324
        %v373 = vunpack.c.l.bf16 %v325
        %v374 = vunpack.c.l.bf16 %v326
        %v375 = vunpack.c.l.bf16 %v327
        %v376 = vunpack.c.l.bf16 %v328
        %v377 = vunpack.c.l.bf16 %v329
        %v378 = vunpack.c.l.bf16 %v330
        %v379 = vunpack.c.l.bf16 %v331
        %v380 = vunpack.c.l.bf16 %v332
        %v381 = vunpack.c.l.bf16 %v333
        %v382 = vunpack.c.l.bf16 %v334
        %v383 = vunpack.c.l.bf16 %v335
        %v384 = vunpack.c.l.bf16 %v336
        %v385 = vunpack.c.l.bf16 %v337
        %v386 = vunpack.c.l.bf16 %v338
        %v387 = vunpack.c.l.bf16 %v339
        %v388 = vunpack.c.l.bf16 %v340
        %v389 = vunpack.c.l.bf16 %v341
        %v390 = vunpack.c.l.bf16 %v342
        %v391 = vunpack.c.l.bf16 %v343
        %v392 = vunpack.c.l.bf16 %v344
        %v393 = vunpack.c.l.bf16 %v345
        %v394 = vunpack.c.l.bf16 %v346
        %v395 = vunpack.c.l.bf16 %v347
        %v396 = vunpack.c.l.bf16 %v348
        %s397 = scalar_lea.vmem %s255, 12 [#allocation3]
        %v398 = vld [vmem:[%s397] sm:$0xf]
        %v399 = vld [vmem:[%s397 + $0x4] sm:$0xf]
        %v400 = vld [vmem:[%s397 + $0x8] sm:$0xf]
        %v401 = vld [vmem:[%s397 + $0x60] sm:$0xf]
        %v402 = vld [vmem:[%s397 + $0x64] sm:$0xf]
        %v403 = vld [vmem:[%s397 + $0x68] sm:$0xf]
        %v404 = vld [vmem:[%s397 + $0xc0] sm:$0xf]
        %v405 = vld [vmem:[%s397 + $0xc4] sm:$0xf]
        %v406 = vld [vmem:[%s397 + $0xc8] sm:$0xf]
        %v407 = vld [vmem:[%s397 + $0x120] sm:$0xf]
        %v408 = vld [vmem:[%s397 + $0x124] sm:$0xf]
        %v409 = vld [vmem:[%s397 + $0x128] sm:$0xf]
        %v410 = vld [vmem:[%s397 + $0x180] sm:$0xf]
        %v411 = vld [vmem:[%s397 + $0x184] sm:$0xf]
        %v412 = vld [vmem:[%s397 + $0x188] sm:$0xf]
        %v413 = vld [vmem:[%s397 + $0x1e0] sm:$0xf]
        %v414 = vld [vmem:[%s397 + $0x1e4] sm:$0xf]
        %v415 = vld [vmem:[%s397 + $0x1e8] sm:$0xf]
        %v416 = vld [vmem:[%s397 + $0x240] sm:$0xf]
        %v417 = vld [vmem:[%s397 + $0x244] sm:$0xf]
        %v418 = vld [vmem:[%s397 + $0x248] sm:$0xf]
        %v419 = vld [vmem:[%s397 + $0x2a0] sm:$0xf]
        %v420 = vld [vmem:[%s397 + $0x2a4] sm:$0xf]
        %v421 = vld [vmem:[%s397 + $0x2a8] sm:$0xf]
        %v422 = vld [vmem:[%s397 + $0x300] sm:$0xf]
        %v423 = vld [vmem:[%s397 + $0x304] sm:$0xf]
        %v424 = vld [vmem:[%s397 + $0x308] sm:$0xf]
        %v425 = vld [vmem:[%s397 + $0x360] sm:$0xf]
        %v426 = vld [vmem:[%s397 + $0x364] sm:$0xf]
        %v427 = vld [vmem:[%s397 + $0x368] sm:$0xf]
        %v428 = vld [vmem:[%s397 + $0x3c0] sm:$0xf]
        %v429 = vld [vmem:[%s397 + $0x3c4] sm:$0xf]
        %v430 = vld [vmem:[%s397 + $0x3c8] sm:$0xf]
        %v431 = vld [vmem:[%s397 + $0x420] sm:$0xf]
        %v432 = vld [vmem:[%s397 + $0x424] sm:$0xf]
        %v433 = vld [vmem:[%s397 + $0x428] sm:$0xf]
        %v434 = vld [vmem:[%s397 + $0x480] sm:$0xf]
        %v435 = vld [vmem:[%s397 + $0x484] sm:$0xf]
        %v436 = vld [vmem:[%s397 + $0x488] sm:$0xf]
        %v437 = vld [vmem:[%s397 + $0x4e0] sm:$0xf]
        %v438 = vld [vmem:[%s397 + $0x4e4] sm:$0xf]
        %v439 = vld [vmem:[%s397 + $0x4e8] sm:$0xf]
        %v440 = vld [vmem:[%s397 + $0x540] sm:$0xf]
        %v441 = vld [vmem:[%s397 + $0x544] sm:$0xf]
        %v442 = vld [vmem:[%s397 + $0x548] sm:$0xf]
        %v443 = vld [vmem:[%s397 + $0x5a0] sm:$0xf]
        %v444 = vld [vmem:[%s397 + $0x5a4] sm:$0xf]
        %v445 = vld [vmem:[%s397 + $0x5a8] sm:$0xf]
        %v446 = vunpack.c.l.bf16 %v398
        %v447 = vunpack.c.l.bf16 %v399
        %v448 = vunpack.c.l.bf16 %v400
        %v449 = vunpack.c.l.bf16 %v401
        %v450 = vunpack.c.l.bf16 %v402
        %v451 = vunpack.c.l.bf16 %v403
        %v452 = vunpack.c.l.bf16 %v404
        %v453 = vunpack.c.l.bf16 %v405
        %v454 = vunpack.c.l.bf16 %v406
        %v455 = vunpack.c.l.bf16 %v407
        %v456 = vunpack.c.l.bf16 %v408
        %v457 = vunpack.c.l.bf16 %v409
        %v458 = vunpack.c.l.bf16 %v410
        %v459 = vunpack.c.l.bf16 %v411
        %v460 = vunpack.c.l.bf16 %v412
        %v461 = vunpack.c.l.bf16 %v413
        %v462 = vunpack.c.l.bf16 %v414
        %v463 = vunpack.c.l.bf16 %v415
        %v464 = vunpack.c.l.bf16 %v416
        %v465 = vunpack.c.l.bf16 %v417
        %v466 = vunpack.c.l.bf16 %v418
        %v467 = vunpack.c.l.bf16 %v419
        %v468 = vunpack.c.l.bf16 %v420
        %v469 = vunpack.c.l.bf16 %v421
        %v470 = vunpack.c.l.bf16 %v422
        %v471 = vunpack.c.l.bf16 %v423
        %v472 = vunpack.c.l.bf16 %v424
        %v473 = vunpack.c.l.bf16 %v425
        %v474 = vunpack.c.l.bf16 %v426
        %v475 = vunpack.c.l.bf16 %v427
        %v476 = vunpack.c.l.bf16 %v428
        %v477 = vunpack.c.l.bf16 %v429
        %v478 = vunpack.c.l.bf16 %v430
        %v479 = vunpack.c.l.bf16 %v431
        %v480 = vunpack.c.l.bf16 %v432
        %v481 = vunpack.c.l.bf16 %v433
        %v482 = vunpack.c.l.bf16 %v434
        %v483 = vunpack.c.l.bf16 %v435
        %v484 = vunpack.c.l.bf16 %v436
        %v485 = vunpack.c.l.bf16 %v437
        %v486 = vunpack.c.l.bf16 %v438
        %v487 = vunpack.c.l.bf16 %v439
        %v488 = vunpack.c.l.bf16 %v440
        %v489 = vunpack.c.l.bf16 %v441
        %v490 = vunpack.c.l.bf16 %v442
        %v491 = vunpack.c.l.bf16 %v443
        %v492 = vunpack.c.l.bf16 %v444
        %v493 = vunpack.c.l.bf16 %v445
        %v494 = vadd.f32 %v349, %v446
        %v495 = vadd.f32 %v350, %v447
        %v496 = vadd.f32 %v351, %v448
        %v497 = vadd.f32 %v352, %v449
        %v498 = vadd.f32 %v353, %v450
        %v499 = vadd.f32 %v354, %v451
        %v500 = vadd.f32 %v355, %v452
        %v501 = vadd.f32 %v356, %v453
        %v502 = vadd.f32 %v357, %v454
        %v503 = vadd.f32 %v358, %v455
        %v504 = vadd.f32 %v359, %v456
        %v505 = vadd.f32 %v360, %v457
        %v506 = vadd.f32 %v361, %v458
        %v507 = vadd.f32 %v362, %v459
        %v508 = vadd.f32 %v363, %v460
        %v509 = vadd.f32 %v364, %v461
        %v510 = vadd.f32 %v365, %v462
        %v511 = vadd.f32 %v366, %v463
        %v512 = vadd.f32 %v367, %v464
        %v513 = vadd.f32 %v368, %v465
        %v514 = vadd.f32 %v369, %v466
        %v515 = vadd.f32 %v370, %v467
        %v516 = vadd.f32 %v371, %v468
        %v517 = vadd.f32 %v372, %v469
        %v518 = vadd.f32 %v373, %v470
        %v519 = vadd.f32 %v374, %v471
        %v520 = vadd.f32 %v375, %v472
        %v521 = vadd.f32 %v376, %v473
        %v522 = vadd.f32 %v377, %v474
        %v523 = vadd.f32 %v378, %v475
        %v524 = vadd.f32 %v379, %v476
        %v525 = vadd.f32 %v380, %v477
        %v526 = vadd.f32 %v381, %v478
        %v527 = vadd.f32 %v382, %v479
        %v528 = vadd.f32 %v383, %v480
        %v529 = vadd.f32 %v384, %v481
        %v530 = vadd.f32 %v385, %v482
        %v531 = vadd.f32 %v386, %v483
        %v532 = vadd.f32 %v387, %v484
        %v533 = vadd.f32 %v388, %v485
        %v534 = vadd.f32 %v389, %v486
        %v535 = vadd.f32 %v390, %v487
        %v536 = vadd.f32 %v391, %v488
        %v537 = vadd.f32 %v392, %v489
        %v538 = vadd.f32 %v393, %v490
        %v539 = vadd.f32 %v394, %v491
        %v540 = vadd.f32 %v395, %v492
        %v541 = vadd.f32 %v396, %v493
        %s542 = scalar_lea.vmem %s255, 24 [#allocation3]
        %v543 = vld [vmem:[%s542] sm:$0xf]
        %v544 = vld [vmem:[%s542 + $0x4] sm:$0xf]
        %v545 = vld [vmem:[%s542 + $0x8] sm:$0xf]
        %v546 = vld [vmem:[%s542 + $0x60] sm:$0xf]
        %v547 = vld [vmem:[%s542 + $0x64] sm:$0xf]
        %v548 = vld [vmem:[%s542 + $0x68] sm:$0xf]
        %v549 = vld [vmem:[%s542 + $0xc0] sm:$0xf]
        %v550 = vld [vmem:[%s542 + $0xc4] sm:$0xf]
        %v551 = vld [vmem:[%s542 + $0xc8] sm:$0xf]
        %v552 = vld [vmem:[%s542 + $0x120] sm:$0xf]
        %v553 = vld [vmem:[%s542 + $0x124] sm:$0xf]
        %v554 = vld [vmem:[%s542 + $0x128] sm:$0xf]
        %v555 = vld [vmem:[%s542 + $0x180] sm:$0xf]
        %v556 = vld [vmem:[%s542 + $0x184] sm:$0xf]
        %v557 = vld [vmem:[%s542 + $0x188] sm:$0xf]
        %v558 = vld [vmem:[%s542 + $0x1e0] sm:$0xf]
        %v559 = vld [vmem:[%s542 + $0x1e4] sm:$0xf]
        %v560 = vld [vmem:[%s542 + $0x1e8] sm:$0xf]
        %v561 = vld [vmem:[%s542 + $0x240] sm:$0xf]
        %v562 = vld [vmem:[%s542 + $0x244] sm:$0xf]
        %v563 = vld [vmem:[%s542 + $0x248] sm:$0xf]
        %v564 = vld [vmem:[%s542 + $0x2a0] sm:$0xf]
        %v565 = vld [vmem:[%s542 + $0x2a4] sm:$0xf]
        %v566 = vld [vmem:[%s542 + $0x2a8] sm:$0xf]
        %v567 = vld [vmem:[%s542 + $0x300] sm:$0xf]
        %v568 = vld [vmem:[%s542 + $0x304] sm:$0xf]
        %v569 = vld [vmem:[%s542 + $0x308] sm:$0xf]
        %v570 = vld [vmem:[%s542 + $0x360] sm:$0xf]
        %v571 = vld [vmem:[%s542 + $0x364] sm:$0xf]
        %v572 = vld [vmem:[%s542 + $0x368] sm:$0xf]
        %v573 = vld [vmem:[%s542 + $0x3c0] sm:$0xf]
        %v574 = vld [vmem:[%s542 + $0x3c4] sm:$0xf]
        %v575 = vld [vmem:[%s542 + $0x3c8] sm:$0xf]
        %v576 = vld [vmem:[%s542 + $0x420] sm:$0xf]
        %v577 = vld [vmem:[%s542 + $0x424] sm:$0xf]
        %v578 = vld [vmem:[%s542 + $0x428] sm:$0xf]
        %v579 = vld [vmem:[%s542 + $0x480] sm:$0xf]
        %v580 = vld [vmem:[%s542 + $0x484] sm:$0xf]
        %v581 = vld [vmem:[%s542 + $0x488] sm:$0xf]
        %v582 = vld [vmem:[%s542 + $0x4e0] sm:$0xf]
        %v583 = vld [vmem:[%s542 + $0x4e4] sm:$0xf]
        %v584 = vld [vmem:[%s542 + $0x4e8] sm:$0xf]
        %v585 = vld [vmem:[%s542 + $0x540] sm:$0xf]
        %v586 = vld [vmem:[%s542 + $0x544] sm:$0xf]
        %v587 = vld [vmem:[%s542 + $0x548] sm:$0xf]
        %v588 = vld [vmem:[%s542 + $0x5a0] sm:$0xf]
        %v589 = vld [vmem:[%s542 + $0x5a4] sm:$0xf]
        %v590 = vld [vmem:[%s542 + $0x5a8] sm:$0xf]
        %v591 = vunpack.c.l.bf16 %v543
        %v592 = vunpack.c.l.bf16 %v544
        %v593 = vunpack.c.l.bf16 %v545
        %v594 = vunpack.c.l.bf16 %v546
        %v595 = vunpack.c.l.bf16 %v547
        %v596 = vunpack.c.l.bf16 %v548
        %v597 = vunpack.c.l.bf16 %v549
        %v598 = vunpack.c.l.bf16 %v550
        %v599 = vunpack.c.l.bf16 %v551
        %v600 = vunpack.c.l.bf16 %v552
        %v601 = vunpack.c.l.bf16 %v553
        %v602 = vunpack.c.l.bf16 %v554
        %v603 = vunpack.c.l.bf16 %v555
        %v604 = vunpack.c.l.bf16 %v556
        %v605 = vunpack.c.l.bf16 %v557
        %v606 = vunpack.c.l.bf16 %v558
        %v607 = vunpack.c.l.bf16 %v559
        %v608 = vunpack.c.l.bf16 %v560
        %v609 = vunpack.c.l.bf16 %v561
        %v610 = vunpack.c.l.bf16 %v562
        %v611 = vunpack.c.l.bf16 %v563
        %v612 = vunpack.c.l.bf16 %v564
        %v613 = vunpack.c.l.bf16 %v565
        %v614 = vunpack.c.l.bf16 %v566
        %v615 = vunpack.c.l.bf16 %v567
        %v616 = vunpack.c.l.bf16 %v568
        %v617 = vunpack.c.l.bf16 %v569
        %v618 = vunpack.c.l.bf16 %v570
        %v619 = vunpack.c.l.bf16 %v571
        %v620 = vunpack.c.l.bf16 %v572
        %v621 = vunpack.c.l.bf16 %v573
        %v622 = vunpack.c.l.bf16 %v574
        %v623 = vunpack.c.l.bf16 %v575
        %v624 = vunpack.c.l.bf16 %v576
        %v625 = vunpack.c.l.bf16 %v577
        %v626 = vunpack.c.l.bf16 %v578
        %v627 = vunpack.c.l.bf16 %v579
        %v628 = vunpack.c.l.bf16 %v580
        %v629 = vunpack.c.l.bf16 %v581
        %v630 = vunpack.c.l.bf16 %v582
        %v631 = vunpack.c.l.bf16 %v583
        %v632 = vunpack.c.l.bf16 %v584
        %v633 = vunpack.c.l.bf16 %v585
        %v634 = vunpack.c.l.bf16 %v586
        %v635 = vunpack.c.l.bf16 %v587
        %v636 = vunpack.c.l.bf16 %v588
        %v637 = vunpack.c.l.bf16 %v589
        %v638 = vunpack.c.l.bf16 %v590
        %v639 = vadd.f32 %v494, %v591
        %v640 = vadd.f32 %v495, %v592
        %v641 = vadd.f32 %v496, %v593
        %v642 = vadd.f32 %v497, %v594
        %v643 = vadd.f32 %v498, %v595
        %v644 = vadd.f32 %v499, %v596
        %v645 = vadd.f32 %v500, %v597
        %v646 = vadd.f32 %v501, %v598
        %v647 = vadd.f32 %v502, %v599
        %v648 = vadd.f32 %v503, %v600
        %v649 = vadd.f32 %v504, %v601
        %v650 = vadd.f32 %v505, %v602
        %v651 = vadd.f32 %v506, %v603
        %v652 = vadd.f32 %v507, %v604
        %v653 = vadd.f32 %v508, %v605
        %v654 = vadd.f32 %v509, %v606
        %v655 = vadd.f32 %v510, %v607
        %v656 = vadd.f32 %v511, %v608
        %v657 = vadd.f32 %v512, %v609
        %v658 = vadd.f32 %v513, %v610
        %v659 = vadd.f32 %v514, %v611
        %v660 = vadd.f32 %v515, %v612
        %v661 = vadd.f32 %v516, %v613
        %v662 = vadd.f32 %v517, %v614
        %v663 = vadd.f32 %v518, %v615
        %v664 = vadd.f32 %v519, %v616
        %v665 = vadd.f32 %v520, %v617
        %v666 = vadd.f32 %v521, %v618
        %v667 = vadd.f32 %v522, %v619
        %v668 = vadd.f32 %v523, %v620
        %v669 = vadd.f32 %v524, %v621
        %v670 = vadd.f32 %v525, %v622
        %v671 = vadd.f32 %v526, %v623
        %v672 = vadd.f32 %v527, %v624
        %v673 = vadd.f32 %v528, %v625
        %v674 = vadd.f32 %v529, %v626
        %v675 = vadd.f32 %v530, %v627
        %v676 = vadd.f32 %v531, %v628
        %v677 = vadd.f32 %v532, %v629
        %v678 = vadd.f32 %v533, %v630
        %v679 = vadd.f32 %v534, %v631
        %v680 = vadd.f32 %v535, %v632
        %v681 = vadd.f32 %v536, %v633
        %v682 = vadd.f32 %v537, %v634
        %v683 = vadd.f32 %v538, %v635
        %v684 = vadd.f32 %v539, %v636
        %v685 = vadd.f32 %v540, %v637
        %v686 = vadd.f32 %v541, %v638
        %s687 = scalar_lea.vmem %s255, 36 [#allocation3]
        %v688 = vld [vmem:[%s687] sm:$0xf]
        %v689 = vld [vmem:[%s687 + $0x4] sm:$0xf]
        %v690 = vld [vmem:[%s687 + $0x8] sm:$0xf]
        %v691 = vld [vmem:[%s687 + $0x60] sm:$0xf]
        %v692 = vld [vmem:[%s687 + $0x64] sm:$0xf]
        %v693 = vld [vmem:[%s687 + $0x68] sm:$0xf]
        %v694 = vld [vmem:[%s687 + $0xc0] sm:$0xf]
        %v695 = vld [vmem:[%s687 + $0xc4] sm:$0xf]
        %v696 = vld [vmem:[%s687 + $0xc8] sm:$0xf]
        %v697 = vld [vmem:[%s687 + $0x120] sm:$0xf]
        %v698 = vld [vmem:[%s687 + $0x124] sm:$0xf]
        %v699 = vld [vmem:[%s687 + $0x128] sm:$0xf]
        %v700 = vld [vmem:[%s687 + $0x180] sm:$0xf]
        %v701 = vld [vmem:[%s687 + $0x184] sm:$0xf]
        %v702 = vld [vmem:[%s687 + $0x188] sm:$0xf]
        %v703 = vld [vmem:[%s687 + $0x1e0] sm:$0xf]
        %v704 = vld [vmem:[%s687 + $0x1e4] sm:$0xf]
        %v705 = vld [vmem:[%s687 + $0x1e8] sm:$0xf]
        %v706 = vld [vmem:[%s687 + $0x240] sm:$0xf]
        %v707 = vld [vmem:[%s687 + $0x244] sm:$0xf]
        %v708 = vld [vmem:[%s687 + $0x248] sm:$0xf]
        %v709 = vld [vmem:[%s687 + $0x2a0] sm:$0xf]
        %v710 = vld [vmem:[%s687 + $0x2a4] sm:$0xf]
        %v711 = vld [vmem:[%s687 + $0x2a8] sm:$0xf]
        %v712 = vld [vmem:[%s687 + $0x300] sm:$0xf]
        %v713 = vld [vmem:[%s687 + $0x304] sm:$0xf]
        %v714 = vld [vmem:[%s687 + $0x308] sm:$0xf]
        %v715 = vld [vmem:[%s687 + $0x360] sm:$0xf]
        %v716 = vld [vmem:[%s687 + $0x364] sm:$0xf]
        %v717 = vld [vmem:[%s687 + $0x368] sm:$0xf]
        %v718 = vld [vmem:[%s687 + $0x3c0] sm:$0xf]
        %v719 = vld [vmem:[%s687 + $0x3c4] sm:$0xf]
        %v720 = vld [vmem:[%s687 + $0x3c8] sm:$0xf]
        %v721 = vld [vmem:[%s687 + $0x420] sm:$0xf]
        %v722 = vld [vmem:[%s687 + $0x424] sm:$0xf]
        %v723 = vld [vmem:[%s687 + $0x428] sm:$0xf]
        %v724 = vld [vmem:[%s687 + $0x480] sm:$0xf]
        %v725 = vld [vmem:[%s687 + $0x484] sm:$0xf]
        %v726 = vld [vmem:[%s687 + $0x488] sm:$0xf]
        %v727 = vld [vmem:[%s687 + $0x4e0] sm:$0xf]
        %v728 = vld [vmem:[%s687 + $0x4e4] sm:$0xf]
        %v729 = vld [vmem:[%s687 + $0x4e8] sm:$0xf]
        %v730 = vld [vmem:[%s687 + $0x540] sm:$0xf]
        %v731 = vld [vmem:[%s687 + $0x544] sm:$0xf]
        %v732 = vld [vmem:[%s687 + $0x548] sm:$0xf]
        %v733 = vld [vmem:[%s687 + $0x5a0] sm:$0xf]
        %v734 = vld [vmem:[%s687 + $0x5a4] sm:$0xf]
        %v735 = vld [vmem:[%s687 + $0x5a8] sm:$0xf]
        %v736 = vunpack.c.l.bf16 %v688
        %v737 = vunpack.c.l.bf16 %v689
        %v738 = vunpack.c.l.bf16 %v690
        %v739 = vunpack.c.l.bf16 %v691
        %v740 = vunpack.c.l.bf16 %v692
        %v741 = vunpack.c.l.bf16 %v693
        %v742 = vunpack.c.l.bf16 %v694
        %v743 = vunpack.c.l.bf16 %v695
        %v744 = vunpack.c.l.bf16 %v696
        %v745 = vunpack.c.l.bf16 %v697
        %v746 = vunpack.c.l.bf16 %v698
        %v747 = vunpack.c.l.bf16 %v699
        %v748 = vunpack.c.l.bf16 %v700
        %v749 = vunpack.c.l.bf16 %v701
        %v750 = vunpack.c.l.bf16 %v702
        %v751 = vunpack.c.l.bf16 %v703
        %v752 = vunpack.c.l.bf16 %v704
        %v753 = vunpack.c.l.bf16 %v705
        %v754 = vunpack.c.l.bf16 %v706
        %v755 = vunpack.c.l.bf16 %v707
        %v756 = vunpack.c.l.bf16 %v708
        %v757 = vunpack.c.l.bf16 %v709
        %v758 = vunpack.c.l.bf16 %v710
        %v759 = vunpack.c.l.bf16 %v711
        %v760 = vunpack.c.l.bf16 %v712
        %v761 = vunpack.c.l.bf16 %v713
        %v762 = vunpack.c.l.bf16 %v714
        %v763 = vunpack.c.l.bf16 %v715
        %v764 = vunpack.c.l.bf16 %v716
        %v765 = vunpack.c.l.bf16 %v717
        %v766 = vunpack.c.l.bf16 %v718
        %v767 = vunpack.c.l.bf16 %v719
        %v768 = vunpack.c.l.bf16 %v720
        %v769 = vunpack.c.l.bf16 %v721
        %v770 = vunpack.c.l.bf16 %v722
        %v771 = vunpack.c.l.bf16 %v723
        %v772 = vunpack.c.l.bf16 %v724
        %v773 = vunpack.c.l.bf16 %v725
        %v774 = vunpack.c.l.bf16 %v726
        %v775 = vunpack.c.l.bf16 %v727
        %v776 = vunpack.c.l.bf16 %v728
        %v777 = vunpack.c.l.bf16 %v729
        %v778 = vunpack.c.l.bf16 %v730
        %v779 = vunpack.c.l.bf16 %v731
        %v780 = vunpack.c.l.bf16 %v732
        %v781 = vunpack.c.l.bf16 %v733
        %v782 = vunpack.c.l.bf16 %v734
        %v783 = vunpack.c.l.bf16 %v735
        %v784 = vadd.f32 %v639, %v736
        %v785 = vadd.f32 %v640, %v737
        %v786 = vadd.f32 %v641, %v738
        %v787 = vadd.f32 %v642, %v739
        %v788 = vadd.f32 %v643, %v740
        %v789 = vadd.f32 %v644, %v741
        %v790 = vadd.f32 %v645, %v742
        %v791 = vadd.f32 %v646, %v743
        %v792 = vadd.f32 %v647, %v744
        %v793 = vadd.f32 %v648, %v745
        %v794 = vadd.f32 %v649, %v746
        %v795 = vadd.f32 %v650, %v747
        %v796 = vadd.f32 %v651, %v748
        %v797 = vadd.f32 %v652, %v749
        %v798 = vadd.f32 %v653, %v750
        %v799 = vadd.f32 %v654, %v751
        %v800 = vadd.f32 %v655, %v752
        %v801 = vadd.f32 %v656, %v753
        %v802 = vadd.f32 %v657, %v754
        %v803 = vadd.f32 %v658, %v755
        %v804 = vadd.f32 %v659, %v756
        %v805 = vadd.f32 %v660, %v757
        %v806 = vadd.f32 %v661, %v758
        %v807 = vadd.f32 %v662, %v759
        %v808 = vadd.f32 %v663, %v760
        %v809 = vadd.f32 %v664, %v761
        %v810 = vadd.f32 %v665, %v762
        %v811 = vadd.f32 %v666, %v763
        %v812 = vadd.f32 %v667, %v764
        %v813 = vadd.f32 %v668, %v765
        %v814 = vadd.f32 %v669, %v766
        %v815 = vadd.f32 %v670, %v767
        %v816 = vadd.f32 %v671, %v768
        %v817 = vadd.f32 %v672, %v769
        %v818 = vadd.f32 %v673, %v770
        %v819 = vadd.f32 %v674, %v771
        %v820 = vadd.f32 %v675, %v772
        %v821 = vadd.f32 %v676, %v773
        %v822 = vadd.f32 %v677, %v774
        %v823 = vadd.f32 %v678, %v775
        %v824 = vadd.f32 %v679, %v776
        %v825 = vadd.f32 %v680, %v777
        %v826 = vadd.f32 %v681, %v778
        %v827 = vadd.f32 %v682, %v779
        %v828 = vadd.f32 %v683, %v780
        %v829 = vadd.f32 %v684, %v781
        %v830 = vadd.f32 %v685, %v782
        %v831 = vadd.f32 %v686, %v783
        %s832 = scalar_lea.vmem %s255, 48 [#allocation3]
        %v833 = vld [vmem:[%s832] sm:$0xf]
        %v834 = vld [vmem:[%s832 + $0x4] sm:$0xf]
        %v835 = vld [vmem:[%s832 + $0x8] sm:$0xf]
        %v836 = vld [vmem:[%s832 + $0x60] sm:$0xf]
        %v837 = vld [vmem:[%s832 + $0x64] sm:$0xf]
        %v838 = vld [vmem:[%s832 + $0x68] sm:$0xf]
        %v839 = vld [vmem:[%s832 + $0xc0] sm:$0xf]
        %v840 = vld [vmem:[%s832 + $0xc4] sm:$0xf]
        %v841 = vld [vmem:[%s832 + $0xc8] sm:$0xf]
        %v842 = vld [vmem:[%s832 + $0x120] sm:$0xf]
        %v843 = vld [vmem:[%s832 + $0x124] sm:$0xf]
        %v844 = vld [vmem:[%s832 + $0x128] sm:$0xf]
        %v845 = vld [vmem:[%s832 + $0x180] sm:$0xf]
        %v846 = vld [vmem:[%s832 + $0x184] sm:$0xf]
        %v847 = vld [vmem:[%s832 + $0x188] sm:$0xf]
        %v848 = vld [vmem:[%s832 + $0x1e0] sm:$0xf]
        %v849 = vld [vmem:[%s832 + $0x1e4] sm:$0xf]
        %v850 = vld [vmem:[%s832 + $0x1e8] sm:$0xf]
        %v851 = vld [vmem:[%s832 + $0x240] sm:$0xf]
        %v852 = vld [vmem:[%s832 + $0x244] sm:$0xf]
        %v853 = vld [vmem:[%s832 + $0x248] sm:$0xf]
        %v854 = vld [vmem:[%s832 + $0x2a0] sm:$0xf]
        %v855 = vld [vmem:[%s832 + $0x2a4] sm:$0xf]
        %v856 = vld [vmem:[%s832 + $0x2a8] sm:$0xf]
        %v857 = vld [vmem:[%s832 + $0x300] sm:$0xf]
        %v858 = vld [vmem:[%s832 + $0x304] sm:$0xf]
        %v859 = vld [vmem:[%s832 + $0x308] sm:$0xf]
        %v860 = vld [vmem:[%s832 + $0x360] sm:$0xf]
        %v861 = vld [vmem:[%s832 + $0x364] sm:$0xf]
        %v862 = vld [vmem:[%s832 + $0x368] sm:$0xf]
        %v863 = vld [vmem:[%s832 + $0x3c0] sm:$0xf]
        %v864 = vld [vmem:[%s832 + $0x3c4] sm:$0xf]
        %v865 = vld [vmem:[%s832 + $0x3c8] sm:$0xf]
        %v866 = vld [vmem:[%s832 + $0x420] sm:$0xf]
        %v867 = vld [vmem:[%s832 + $0x424] sm:$0xf]
        %v868 = vld [vmem:[%s832 + $0x428] sm:$0xf]
        %v869 = vld [vmem:[%s832 + $0x480] sm:$0xf]
        %v870 = vld [vmem:[%s832 + $0x484] sm:$0xf]
        %v871 = vld [vmem:[%s832 + $0x488] sm:$0xf]
        %v872 = vld [vmem:[%s832 + $0x4e0] sm:$0xf]
        %v873 = vld [vmem:[%s832 + $0x4e4] sm:$0xf]
        %v874 = vld [vmem:[%s832 + $0x4e8] sm:$0xf]
        %v875 = vld [vmem:[%s832 + $0x540] sm:$0xf]
        %v876 = vld [vmem:[%s832 + $0x544] sm:$0xf]
        %v877 = vld [vmem:[%s832 + $0x548] sm:$0xf]
        %v878 = vld [vmem:[%s832 + $0x5a0] sm:$0xf]
        %v879 = vld [vmem:[%s832 + $0x5a4] sm:$0xf]
        %v880 = vld [vmem:[%s832 + $0x5a8] sm:$0xf]
        %v881 = vunpack.c.l.bf16 %v833
        %v882 = vunpack.c.l.bf16 %v834
        %v883 = vunpack.c.l.bf16 %v835
        %v884 = vunpack.c.l.bf16 %v836
        %v885 = vunpack.c.l.bf16 %v837
        %v886 = vunpack.c.l.bf16 %v838
        %v887 = vunpack.c.l.bf16 %v839
        %v888 = vunpack.c.l.bf16 %v840
        %v889 = vunpack.c.l.bf16 %v841
        %v890 = vunpack.c.l.bf16 %v842
        %v891 = vunpack.c.l.bf16 %v843
        %v892 = vunpack.c.l.bf16 %v844
        %v893 = vunpack.c.l.bf16 %v845
        %v894 = vunpack.c.l.bf16 %v846
        %v895 = vunpack.c.l.bf16 %v847
        %v896 = vunpack.c.l.bf16 %v848
        %v897 = vunpack.c.l.bf16 %v849
        %v898 = vunpack.c.l.bf16 %v850
        %v899 = vunpack.c.l.bf16 %v851
        %v900 = vunpack.c.l.bf16 %v852
        %v901 = vunpack.c.l.bf16 %v853
        %v902 = vunpack.c.l.bf16 %v854
        %v903 = vunpack.c.l.bf16 %v855
        %v904 = vunpack.c.l.bf16 %v856
        %v905 = vunpack.c.l.bf16 %v857
        %v906 = vunpack.c.l.bf16 %v858
        %v907 = vunpack.c.l.bf16 %v859
        %v908 = vunpack.c.l.bf16 %v860
        %v909 = vunpack.c.l.bf16 %v861
        %v910 = vunpack.c.l.bf16 %v862
        %v911 = vunpack.c.l.bf16 %v863
        %v912 = vunpack.c.l.bf16 %v864
        %v913 = vunpack.c.l.bf16 %v865
        %v914 = vunpack.c.l.bf16 %v866
        %v915 = vunpack.c.l.bf16 %v867
        %v916 = vunpack.c.l.bf16 %v868
        %v917 = vunpack.c.l.bf16 %v869
        %v918 = vunpack.c.l.bf16 %v870
        %v919 = vunpack.c.l.bf16 %v871
        %v920 = vunpack.c.l.bf16 %v872
        %v921 = vunpack.c.l.bf16 %v873
        %v922 = vunpack.c.l.bf16 %v874
        %v923 = vunpack.c.l.bf16 %v875
        %v924 = vunpack.c.l.bf16 %v876
        %v925 = vunpack.c.l.bf16 %v877
        %v926 = vunpack.c.l.bf16 %v878
        %v927 = vunpack.c.l.bf16 %v879
        %v928 = vunpack.c.l.bf16 %v880
        %v929 = vadd.f32 %v784, %v881
        %v930 = vadd.f32 %v785, %v882
        %v931 = vadd.f32 %v786, %v883
        %v932 = vadd.f32 %v787, %v884
        %v933 = vadd.f32 %v788, %v885
        %v934 = vadd.f32 %v789, %v886
        %v935 = vadd.f32 %v790, %v887
        %v936 = vadd.f32 %v791, %v888
        %v937 = vadd.f32 %v792, %v889
        %v938 = vadd.f32 %v793, %v890
        %v939 = vadd.f32 %v794, %v891
        %v940 = vadd.f32 %v795, %v892
        %v941 = vadd.f32 %v796, %v893
        %v942 = vadd.f32 %v797, %v894
        %v943 = vadd.f32 %v798, %v895
        %v944 = vadd.f32 %v799, %v896
        %v945 = vadd.f32 %v800, %v897
        %v946 = vadd.f32 %v801, %v898
        %v947 = vadd.f32 %v802, %v899
        %v948 = vadd.f32 %v803, %v900
        %v949 = vadd.f32 %v804, %v901
        %v950 = vadd.f32 %v805, %v902
        %v951 = vadd.f32 %v806, %v903
        %v952 = vadd.f32 %v807, %v904
        %v953 = vadd.f32 %v808, %v905
        %v954 = vadd.f32 %v809, %v906
        %v955 = vadd.f32 %v810, %v907
        %v956 = vadd.f32 %v811, %v908
        %v957 = vadd.f32 %v812, %v909
        %v958 = vadd.f32 %v813, %v910
        %v959 = vadd.f32 %v814, %v911
        %v960 = vadd.f32 %v815, %v912
        %v961 = vadd.f32 %v816, %v913
        %v962 = vadd.f32 %v817, %v914
        %v963 = vadd.f32 %v818, %v915
        %v964 = vadd.f32 %v819, %v916
        %v965 = vadd.f32 %v820, %v917
        %v966 = vadd.f32 %v821, %v918
        %v967 = vadd.f32 %v822, %v919
        %v968 = vadd.f32 %v823, %v920
        %v969 = vadd.f32 %v824, %v921
        %v970 = vadd.f32 %v825, %v922
        %v971 = vadd.f32 %v826, %v923
        %v972 = vadd.f32 %v827, %v924
        %v973 = vadd.f32 %v828, %v925
        %v974 = vadd.f32 %v829, %v926
        %v975 = vadd.f32 %v830, %v927
        %v976 = vadd.f32 %v831, %v928
        %s977 = scalar_lea.vmem %s255, 60 [#allocation3]
        %v978 = vld [vmem:[%s977] sm:$0xf]
        %v979 = vld [vmem:[%s977 + $0x4] sm:$0xf]
        %v980 = vld [vmem:[%s977 + $0x8] sm:$0xf]
        %v981 = vld [vmem:[%s977 + $0x60] sm:$0xf]
        %v982 = vld [vmem:[%s977 + $0x64] sm:$0xf]
        %v983 = vld [vmem:[%s977 + $0x68] sm:$0xf]
        %v984 = vld [vmem:[%s977 + $0xc0] sm:$0xf]
        %v985 = vld [vmem:[%s977 + $0xc4] sm:$0xf]
        %v986 = vld [vmem:[%s977 + $0xc8] sm:$0xf]
        %v987 = vld [vmem:[%s977 + $0x120] sm:$0xf]
        %v988 = vld [vmem:[%s977 + $0x124] sm:$0xf]
        %v989 = vld [vmem:[%s977 + $0x128] sm:$0xf]
        %v990 = vld [vmem:[%s977 + $0x180] sm:$0xf]
        %v991 = vld [vmem:[%s977 + $0x184] sm:$0xf]
        %v992 = vld [vmem:[%s977 + $0x188] sm:$0xf]
        %v993 = vld [vmem:[%s977 + $0x1e0] sm:$0xf]
        %v994 = vld [vmem:[%s977 + $0x1e4] sm:$0xf]
        %v995 = vld [vmem:[%s977 + $0x1e8] sm:$0xf]
        %v996 = vld [vmem:[%s977 + $0x240] sm:$0xf]
        %v997 = vld [vmem:[%s977 + $0x244] sm:$0xf]
        %v998 = vld [vmem:[%s977 + $0x248] sm:$0xf]
        %v999 = vld [vmem:[%s977 + $0x2a0] sm:$0xf]
        %v1000 = vld [vmem:[%s977 + $0x2a4] sm:$0xf]
        %v1001 = vld [vmem:[%s977 + $0x2a8] sm:$0xf]
        %v1002 = vld [vmem:[%s977 + $0x300] sm:$0xf]
        %v1003 = vld [vmem:[%s977 + $0x304] sm:$0xf]
        %v1004 = vld [vmem:[%s977 + $0x308] sm:$0xf]
        %v1005 = vld [vmem:[%s977 + $0x360] sm:$0xf]
        %v1006 = vld [vmem:[%s977 + $0x364] sm:$0xf]
        %v1007 = vld [vmem:[%s977 + $0x368] sm:$0xf]
        %v1008 = vld [vmem:[%s977 + $0x3c0] sm:$0xf]
        %v1009 = vld [vmem:[%s977 + $0x3c4] sm:$0xf]
        %v1010 = vld [vmem:[%s977 + $0x3c8] sm:$0xf]
        %v1011 = vld [vmem:[%s977 + $0x420] sm:$0xf]
        %v1012 = vld [vmem:[%s977 + $0x424] sm:$0xf]
        %v1013 = vld [vmem:[%s977 + $0x428] sm:$0xf]
        %v1014 = vld [vmem:[%s977 + $0x480] sm:$0xf]
        %v1015 = vld [vmem:[%s977 + $0x484] sm:$0xf]
        %v1016 = vld [vmem:[%s977 + $0x488] sm:$0xf]
        %v1017 = vld [vmem:[%s977 + $0x4e0] sm:$0xf]
        %v1018 = vld [vmem:[%s977 + $0x4e4] sm:$0xf]
        %v1019 = vld [vmem:[%s977 + $0x4e8] sm:$0xf]
        %v1020 = vld [vmem:[%s977 + $0x540] sm:$0xf]
        %v1021 = vld [vmem:[%s977 + $0x544] sm:$0xf]
        %v1022 = vld [vmem:[%s977 + $0x548] sm:$0xf]
        %v1023 = vld [vmem:[%s977 + $0x5a0] sm:$0xf]
        %v1024 = vld [vmem:[%s977 + $0x5a4] sm:$0xf]
        %v1025 = vld [vmem:[%s977 + $0x5a8] sm:$0xf]
        %v1026 = vunpack.c.l.bf16 %v978
        %v1027 = vunpack.c.l.bf16 %v979
        %v1028 = vunpack.c.l.bf16 %v980
        %v1029 = vunpack.c.l.bf16 %v981
        %v1030 = vunpack.c.l.bf16 %v982
        %v1031 = vunpack.c.l.bf16 %v983
        %v1032 = vunpack.c.l.bf16 %v984
        %v1033 = vunpack.c.l.bf16 %v985
        %v1034 = vunpack.c.l.bf16 %v986
        %v1035 = vunpack.c.l.bf16 %v987
        %v1036 = vunpack.c.l.bf16 %v988
        %v1037 = vunpack.c.l.bf16 %v989
        %v1038 = vunpack.c.l.bf16 %v990
        %v1039 = vunpack.c.l.bf16 %v991
        %v1040 = vunpack.c.l.bf16 %v992
        %v1041 = vunpack.c.l.bf16 %v993
        %v1042 = vunpack.c.l.bf16 %v994
        %v1043 = vunpack.c.l.bf16 %v995
        %v1044 = vunpack.c.l.bf16 %v996
        %v1045 = vunpack.c.l.bf16 %v997
        %v1046 = vunpack.c.l.bf16 %v998
        %v1047 = vunpack.c.l.bf16 %v999
        %v1048 = vunpack.c.l.bf16 %v1000
        %v1049 = vunpack.c.l.bf16 %v1001
        %v1050 = vunpack.c.l.bf16 %v1002
        %v1051 = vunpack.c.l.bf16 %v1003
        %v1052 = vunpack.c.l.bf16 %v1004
        %v1053 = vunpack.c.l.bf16 %v1005
        %v1054 = vunpack.c.l.bf16 %v1006
        %v1055 = vunpack.c.l.bf16 %v1007
        %v1056 = vunpack.c.l.bf16 %v1008
        %v1057 = vunpack.c.l.bf16 %v1009
        %v1058 = vunpack.c.l.bf16 %v1010
        %v1059 = vunpack.c.l.bf16 %v1011
        %v1060 = vunpack.c.l.bf16 %v1012
        %v1061 = vunpack.c.l.bf16 %v1013
        %v1062 = vunpack.c.l.bf16 %v1014
        %v1063 = vunpack.c.l.bf16 %v1015
        %v1064 = vunpack.c.l.bf16 %v1016
        %v1065 = vunpack.c.l.bf16 %v1017
        %v1066 = vunpack.c.l.bf16 %v1018
        %v1067 = vunpack.c.l.bf16 %v1019
        %v1068 = vunpack.c.l.bf16 %v1020
        %v1069 = vunpack.c.l.bf16 %v1021
        %v1070 = vunpack.c.l.bf16 %v1022
        %v1071 = vunpack.c.l.bf16 %v1023
        %v1072 = vunpack.c.l.bf16 %v1024
        %v1073 = vunpack.c.l.bf16 %v1025
        %v1074 = vadd.f32 %v929, %v1026
        %v1075 = vadd.f32 %v930, %v1027
        %v1076 = vadd.f32 %v931, %v1028
        %v1077 = vadd.f32 %v932, %v1029
        %v1078 = vadd.f32 %v933, %v1030
        %v1079 = vadd.f32 %v934, %v1031
        %v1080 = vadd.f32 %v935, %v1032
        %v1081 = vadd.f32 %v936, %v1033
        %v1082 = vadd.f32 %v937, %v1034
        %v1083 = vadd.f32 %v938, %v1035
        %v1084 = vadd.f32 %v939, %v1036
        %v1085 = vadd.f32 %v940, %v1037
        %v1086 = vadd.f32 %v941, %v1038
        %v1087 = vadd.f32 %v942, %v1039
        %v1088 = vadd.f32 %v943, %v1040
        %v1089 = vadd.f32 %v944, %v1041
        %v1090 = vadd.f32 %v945, %v1042
        %v1091 = vadd.f32 %v946, %v1043
        %v1092 = vadd.f32 %v947, %v1044
        %v1093 = vadd.f32 %v948, %v1045
        %v1094 = vadd.f32 %v949, %v1046
        %v1095 = vadd.f32 %v950, %v1047
        %v1096 = vadd.f32 %v951, %v1048
        %v1097 = vadd.f32 %v952, %v1049
        %v1098 = vadd.f32 %v953, %v1050
        %v1099 = vadd.f32 %v954, %v1051
        %v1100 = vadd.f32 %v955, %v1052
        %v1101 = vadd.f32 %v956, %v1053
        %v1102 = vadd.f32 %v957, %v1054
        %v1103 = vadd.f32 %v958, %v1055
        %v1104 = vadd.f32 %v959, %v1056
        %v1105 = vadd.f32 %v960, %v1057
        %v1106 = vadd.f32 %v961, %v1058
        %v1107 = vadd.f32 %v962, %v1059
        %v1108 = vadd.f32 %v963, %v1060
        %v1109 = vadd.f32 %v964, %v1061
        %v1110 = vadd.f32 %v965, %v1062
        %v1111 = vadd.f32 %v966, %v1063
        %v1112 = vadd.f32 %v967, %v1064
        %v1113 = vadd.f32 %v968, %v1065
        %v1114 = vadd.f32 %v969, %v1066
        %v1115 = vadd.f32 %v970, %v1067
        %v1116 = vadd.f32 %v971, %v1068
        %v1117 = vadd.f32 %v972, %v1069
        %v1118 = vadd.f32 %v973, %v1070
        %v1119 = vadd.f32 %v974, %v1071
        %v1120 = vadd.f32 %v975, %v1072
        %v1121 = vadd.f32 %v976, %v1073
        %s1122 = scalar_lea.vmem %s255, 72 [#allocation3]
        %v1123 = vld [vmem:[%s1122] sm:$0xf]
        %v1124 = vld [vmem:[%s1122 + $0x4] sm:$0xf]
        %v1125 = vld [vmem:[%s1122 + $0x8] sm:$0xf]
        %v1126 = vld [vmem:[%s1122 + $0x60] sm:$0xf]
        %v1127 = vld [vmem:[%s1122 + $0x64] sm:$0xf]
        %v1128 = vld [vmem:[%s1122 + $0x68] sm:$0xf]
        %v1129 = vld [vmem:[%s1122 + $0xc0] sm:$0xf]
        %v1130 = vld [vmem:[%s1122 + $0xc4] sm:$0xf]
        %v1131 = vld [vmem:[%s1122 + $0xc8] sm:$0xf]
        %v1132 = vld [vmem:[%s1122 + $0x120] sm:$0xf]
        %v1133 = vld [vmem:[%s1122 + $0x124] sm:$0xf]
        %v1134 = vld [vmem:[%s1122 + $0x128] sm:$0xf]
        %v1135 = vld [vmem:[%s1122 + $0x180] sm:$0xf]
        %v1136 = vld [vmem:[%s1122 + $0x184] sm:$0xf]
        %v1137 = vld [vmem:[%s1122 + $0x188] sm:$0xf]
        %v1138 = vld [vmem:[%s1122 + $0x1e0] sm:$0xf]
        %v1139 = vld [vmem:[%s1122 + $0x1e4] sm:$0xf]
        %v1140 = vld [vmem:[%s1122 + $0x1e8] sm:$0xf]
        %v1141 = vld [vmem:[%s1122 + $0x240] sm:$0xf]
        %v1142 = vld [vmem:[%s1122 + $0x244] sm:$0xf]
        %v1143 = vld [vmem:[%s1122 + $0x248] sm:$0xf]
        %v1144 = vld [vmem:[%s1122 + $0x2a0] sm:$0xf]
        %v1145 = vld [vmem:[%s1122 + $0x2a4] sm:$0xf]
        %v1146 = vld [vmem:[%s1122 + $0x2a8] sm:$0xf]
        %v1147 = vld [vmem:[%s1122 + $0x300] sm:$0xf]
        %v1148 = vld [vmem:[%s1122 + $0x304] sm:$0xf]
        %v1149 = vld [vmem:[%s1122 + $0x308] sm:$0xf]
        %v1150 = vld [vmem:[%s1122 + $0x360] sm:$0xf]
        %v1151 = vld [vmem:[%s1122 + $0x364] sm:$0xf]
        %v1152 = vld [vmem:[%s1122 + $0x368] sm:$0xf]
        %v1153 = vld [vmem:[%s1122 + $0x3c0] sm:$0xf]
        %v1154 = vld [vmem:[%s1122 + $0x3c4] sm:$0xf]
        %v1155 = vld [vmem:[%s1122 + $0x3c8] sm:$0xf]
        %v1156 = vld [vmem:[%s1122 + $0x420] sm:$0xf]
        %v1157 = vld [vmem:[%s1122 + $0x424] sm:$0xf]
        %v1158 = vld [vmem:[%s1122 + $0x428] sm:$0xf]
        %v1159 = vld [vmem:[%s1122 + $0x480] sm:$0xf]
        %v1160 = vld [vmem:[%s1122 + $0x484] sm:$0xf]
        %v1161 = vld [vmem:[%s1122 + $0x488] sm:$0xf]
        %v1162 = vld [vmem:[%s1122 + $0x4e0] sm:$0xf]
        %v1163 = vld [vmem:[%s1122 + $0x4e4] sm:$0xf]
        %v1164 = vld [vmem:[%s1122 + $0x4e8] sm:$0xf]
        %v1165 = vld [vmem:[%s1122 + $0x540] sm:$0xf]
        %v1166 = vld [vmem:[%s1122 + $0x544] sm:$0xf]
        %v1167 = vld [vmem:[%s1122 + $0x548] sm:$0xf]
        %v1168 = vld [vmem:[%s1122 + $0x5a0] sm:$0xf]
        %v1169 = vld [vmem:[%s1122 + $0x5a4] sm:$0xf]
        %v1170 = vld [vmem:[%s1122 + $0x5a8] sm:$0xf]
        %v1171 = vunpack.c.l.bf16 %v1123
        %v1172 = vunpack.c.l.bf16 %v1124
        %v1173 = vunpack.c.l.bf16 %v1125
        %v1174 = vunpack.c.l.bf16 %v1126
        %v1175 = vunpack.c.l.bf16 %v1127
        %v1176 = vunpack.c.l.bf16 %v1128
        %v1177 = vunpack.c.l.bf16 %v1129
        %v1178 = vunpack.c.l.bf16 %v1130
        %v1179 = vunpack.c.l.bf16 %v1131
        %v1180 = vunpack.c.l.bf16 %v1132
        %v1181 = vunpack.c.l.bf16 %v1133
        %v1182 = vunpack.c.l.bf16 %v1134
        %v1183 = vunpack.c.l.bf16 %v1135
        %v1184 = vunpack.c.l.bf16 %v1136
        %v1185 = vunpack.c.l.bf16 %v1137
        %v1186 = vunpack.c.l.bf16 %v1138
        %v1187 = vunpack.c.l.bf16 %v1139
        %v1188 = vunpack.c.l.bf16 %v1140
        %v1189 = vunpack.c.l.bf16 %v1141
        %v1190 = vunpack.c.l.bf16 %v1142
        %v1191 = vunpack.c.l.bf16 %v1143
        %v1192 = vunpack.c.l.bf16 %v1144
        %v1193 = vunpack.c.l.bf16 %v1145
        %v1194 = vunpack.c.l.bf16 %v1146
        %v1195 = vunpack.c.l.bf16 %v1147
        %v1196 = vunpack.c.l.bf16 %v1148
        %v1197 = vunpack.c.l.bf16 %v1149
        %v1198 = vunpack.c.l.bf16 %v1150
        %v1199 = vunpack.c.l.bf16 %v1151
        %v1200 = vunpack.c.l.bf16 %v1152
        %v1201 = vunpack.c.l.bf16 %v1153
        %v1202 = vunpack.c.l.bf16 %v1154
        %v1203 = vunpack.c.l.bf16 %v1155
        %v1204 = vunpack.c.l.bf16 %v1156
        %v1205 = vunpack.c.l.bf16 %v1157
        %v1206 = vunpack.c.l.bf16 %v1158
        %v1207 = vunpack.c.l.bf16 %v1159
        %v1208 = vunpack.c.l.bf16 %v1160
        %v1209 = vunpack.c.l.bf16 %v1161
        %v1210 = vunpack.c.l.bf16 %v1162
        %v1211 = vunpack.c.l.bf16 %v1163
        %v1212 = vunpack.c.l.bf16 %v1164
        %v1213 = vunpack.c.l.bf16 %v1165
        %v1214 = vunpack.c.l.bf16 %v1166
        %v1215 = vunpack.c.l.bf16 %v1167
        %v1216 = vunpack.c.l.bf16 %v1168
        %v1217 = vunpack.c.l.bf16 %v1169
        %v1218 = vunpack.c.l.bf16 %v1170
        %v1219 = vadd.f32 %v1074, %v1171
        %v1220 = vadd.f32 %v1075, %v1172
        %v1221 = vadd.f32 %v1076, %v1173
        %v1222 = vadd.f32 %v1077, %v1174
        %v1223 = vadd.f32 %v1078, %v1175
        %v1224 = vadd.f32 %v1079, %v1176
        %v1225 = vadd.f32 %v1080, %v1177
        %v1226 = vadd.f32 %v1081, %v1178
        %v1227 = vadd.f32 %v1082, %v1179
        %v1228 = vadd.f32 %v1083, %v1180
        %v1229 = vadd.f32 %v1084, %v1181
        %v1230 = vadd.f32 %v1085, %v1182
        %v1231 = vadd.f32 %v1086, %v1183
        %v1232 = vadd.f32 %v1087, %v1184
        %v1233 = vadd.f32 %v1088, %v1185
        %v1234 = vadd.f32 %v1089, %v1186
        %v1235 = vadd.f32 %v1090, %v1187
        %v1236 = vadd.f32 %v1091, %v1188
        %v1237 = vadd.f32 %v1092, %v1189
        %v1238 = vadd.f32 %v1093, %v1190
        %v1239 = vadd.f32 %v1094, %v1191
        %v1240 = vadd.f32 %v1095, %v1192
        %v1241 = vadd.f32 %v1096, %v1193
        %v1242 = vadd.f32 %v1097, %v1194
        %v1243 = vadd.f32 %v1098, %v1195
        %v1244 = vadd.f32 %v1099, %v1196
        %v1245 = vadd.f32 %v1100, %v1197
        %v1246 = vadd.f32 %v1101, %v1198
        %v1247 = vadd.f32 %v1102, %v1199
        %v1248 = vadd.f32 %v1103, %v1200
        %v1249 = vadd.f32 %v1104, %v1201
        %v1250 = vadd.f32 %v1105, %v1202
        %v1251 = vadd.f32 %v1106, %v1203
        %v1252 = vadd.f32 %v1107, %v1204
        %v1253 = vadd.f32 %v1108, %v1205
        %v1254 = vadd.f32 %v1109, %v1206
        %v1255 = vadd.f32 %v1110, %v1207
        %v1256 = vadd.f32 %v1111, %v1208
        %v1257 = vadd.f32 %v1112, %v1209
        %v1258 = vadd.f32 %v1113, %v1210
        %v1259 = vadd.f32 %v1114, %v1211
        %v1260 = vadd.f32 %v1115, %v1212
        %v1261 = vadd.f32 %v1116, %v1213
        %v1262 = vadd.f32 %v1117, %v1214
        %v1263 = vadd.f32 %v1118, %v1215
        %v1264 = vadd.f32 %v1119, %v1216
        %v1265 = vadd.f32 %v1120, %v1217
        %v1266 = vadd.f32 %v1121, %v1218
        %s1267 = scalar_lea.vmem %s255, 84 [#allocation3]
        %v1268 = vld [vmem:[%s1267] sm:$0xf]
        %v1269 = vld [vmem:[%s1267 + $0x4] sm:$0xf]
        %v1270 = vld [vmem:[%s1267 + $0x8] sm:$0xf]
        %v1271 = vld [vmem:[%s1267 + $0x60] sm:$0xf]
        %v1272 = vld [vmem:[%s1267 + $0x64] sm:$0xf]
        %v1273 = vld [vmem:[%s1267 + $0x68] sm:$0xf]
        %v1274 = vld [vmem:[%s1267 + $0xc0] sm:$0xf]
        %v1275 = vld [vmem:[%s1267 + $0xc4] sm:$0xf]
        %v1276 = vld [vmem:[%s1267 + $0xc8] sm:$0xf]
        %v1277 = vld [vmem:[%s1267 + $0x120] sm:$0xf]
        %v1278 = vld [vmem:[%s1267 + $0x124] sm:$0xf]
        %v1279 = vld [vmem:[%s1267 + $0x128] sm:$0xf]
        %v1280 = vld [vmem:[%s1267 + $0x180] sm:$0xf]
        %v1281 = vld [vmem:[%s1267 + $0x184] sm:$0xf]
        %v1282 = vld [vmem:[%s1267 + $0x188] sm:$0xf]
        %v1283 = vld [vmem:[%s1267 + $0x1e0] sm:$0xf]
        %v1284 = vld [vmem:[%s1267 + $0x1e4] sm:$0xf]
        %v1285 = vld [vmem:[%s1267 + $0x1e8] sm:$0xf]
        %v1286 = vld [vmem:[%s1267 + $0x240] sm:$0xf]
        %v1287 = vld [vmem:[%s1267 + $0x244] sm:$0xf]
        %v1288 = vld [vmem:[%s1267 + $0x248] sm:$0xf]
        %v1289 = vld [vmem:[%s1267 + $0x2a0] sm:$0xf]
        %v1290 = vld [vmem:[%s1267 + $0x2a4] sm:$0xf]
        %v1291 = vld [vmem:[%s1267 + $0x2a8] sm:$0xf]
        %v1292 = vld [vmem:[%s1267 + $0x300] sm:$0xf]
        %v1293 = vld [vmem:[%s1267 + $0x304] sm:$0xf]
        %v1294 = vld [vmem:[%s1267 + $0x308] sm:$0xf]
        %v1295 = vld [vmem:[%s1267 + $0x360] sm:$0xf]
        %v1296 = vld [vmem:[%s1267 + $0x364] sm:$0xf]
        %v1297 = vld [vmem:[%s1267 + $0x368] sm:$0xf]
        %v1298 = vld [vmem:[%s1267 + $0x3c0] sm:$0xf]
        %v1299 = vld [vmem:[%s1267 + $0x3c4] sm:$0xf]
        %v1300 = vld [vmem:[%s1267 + $0x3c8] sm:$0xf]
        %v1301 = vld [vmem:[%s1267 + $0x420] sm:$0xf]
        %v1302 = vld [vmem:[%s1267 + $0x424] sm:$0xf]
        %v1303 = vld [vmem:[%s1267 + $0x428] sm:$0xf]
        %v1304 = vld [vmem:[%s1267 + $0x480] sm:$0xf]
        %v1305 = vld [vmem:[%s1267 + $0x484] sm:$0xf]
        %v1306 = vld [vmem:[%s1267 + $0x488] sm:$0xf]
        %v1307 = vld [vmem:[%s1267 + $0x4e0] sm:$0xf]
        %v1308 = vld [vmem:[%s1267 + $0x4e4] sm:$0xf]
        %v1309 = vld [vmem:[%s1267 + $0x4e8] sm:$0xf]
        %v1310 = vld [vmem:[%s1267 + $0x540] sm:$0xf]
        %v1311 = vld [vmem:[%s1267 + $0x544] sm:$0xf]
        %v1312 = vld [vmem:[%s1267 + $0x548] sm:$0xf]
        %v1313 = vld [vmem:[%s1267 + $0x5a0] sm:$0xf]
        %v1314 = vld [vmem:[%s1267 + $0x5a4] sm:$0xf]
        %v1315 = vld [vmem:[%s1267 + $0x5a8] sm:$0xf]
        %v1316 = vunpack.c.l.bf16 %v1268
        %v1317 = vunpack.c.l.bf16 %v1269
        %v1318 = vunpack.c.l.bf16 %v1270
        %v1319 = vunpack.c.l.bf16 %v1271
        %v1320 = vunpack.c.l.bf16 %v1272
        %v1321 = vunpack.c.l.bf16 %v1273
        %v1322 = vunpack.c.l.bf16 %v1274
        %v1323 = vunpack.c.l.bf16 %v1275
        %v1324 = vunpack.c.l.bf16 %v1276
        %v1325 = vunpack.c.l.bf16 %v1277
        %v1326 = vunpack.c.l.bf16 %v1278
        %v1327 = vunpack.c.l.bf16 %v1279
        %v1328 = vunpack.c.l.bf16 %v1280
        %v1329 = vunpack.c.l.bf16 %v1281
        %v1330 = vunpack.c.l.bf16 %v1282
        %v1331 = vunpack.c.l.bf16 %v1283
        %v1332 = vunpack.c.l.bf16 %v1284
        %v1333 = vunpack.c.l.bf16 %v1285
        %v1334 = vunpack.c.l.bf16 %v1286
        %v1335 = vunpack.c.l.bf16 %v1287
        %v1336 = vunpack.c.l.bf16 %v1288
        %v1337 = vunpack.c.l.bf16 %v1289
        %v1338 = vunpack.c.l.bf16 %v1290
        %v1339 = vunpack.c.l.bf16 %v1291
        %v1340 = vunpack.c.l.bf16 %v1292
        %v1341 = vunpack.c.l.bf16 %v1293
        %v1342 = vunpack.c.l.bf16 %v1294
        %v1343 = vunpack.c.l.bf16 %v1295
        %v1344 = vunpack.c.l.bf16 %v1296
        %v1345 = vunpack.c.l.bf16 %v1297
        %v1346 = vunpack.c.l.bf16 %v1298
        %v1347 = vunpack.c.l.bf16 %v1299
        %v1348 = vunpack.c.l.bf16 %v1300
        %v1349 = vunpack.c.l.bf16 %v1301
        %v1350 = vunpack.c.l.bf16 %v1302
        %v1351 = vunpack.c.l.bf16 %v1303
        %v1352 = vunpack.c.l.bf16 %v1304
        %v1353 = vunpack.c.l.bf16 %v1305
        %v1354 = vunpack.c.l.bf16 %v1306
        %v1355 = vunpack.c.l.bf16 %v1307
        %v1356 = vunpack.c.l.bf16 %v1308
        %v1357 = vunpack.c.l.bf16 %v1309
        %v1358 = vunpack.c.l.bf16 %v1310
        %v1359 = vunpack.c.l.bf16 %v1311
        %v1360 = vunpack.c.l.bf16 %v1312
        %v1361 = vunpack.c.l.bf16 %v1313
        %v1362 = vunpack.c.l.bf16 %v1314
        %v1363 = vunpack.c.l.bf16 %v1315
        %v1364 = vadd.f32 %v1219, %v1316
        %v1365 = vadd.f32 %v1220, %v1317
        %v1366 = vadd.f32 %v1221, %v1318
        %v1367 = vadd.f32 %v1222, %v1319
        %v1368 = vadd.f32 %v1223, %v1320
        %v1369 = vadd.f32 %v1224, %v1321
        %v1370 = vadd.f32 %v1225, %v1322
        %v1371 = vadd.f32 %v1226, %v1323
        %v1372 = vadd.f32 %v1227, %v1324
        %v1373 = vadd.f32 %v1228, %v1325
        %v1374 = vadd.f32 %v1229, %v1326
        %v1375 = vadd.f32 %v1230, %v1327
        %v1376 = vadd.f32 %v1231, %v1328
        %v1377 = vadd.f32 %v1232, %v1329
        %v1378 = vadd.f32 %v1233, %v1330
        %v1379 = vadd.f32 %v1234, %v1331
        %v1380 = vadd.f32 %v1235, %v1332
        %v1381 = vadd.f32 %v1236, %v1333
        %v1382 = vadd.f32 %v1237, %v1334
        %v1383 = vadd.f32 %v1238, %v1335
        %v1384 = vadd.f32 %v1239, %v1336
        %v1385 = vadd.f32 %v1240, %v1337
        %v1386 = vadd.f32 %v1241, %v1338
        %v1387 = vadd.f32 %v1242, %v1339
        %v1388 = vadd.f32 %v1243, %v1340
        %v1389 = vadd.f32 %v1244, %v1341
        %v1390 = vadd.f32 %v1245, %v1342
        %v1391 = vadd.f32 %v1246, %v1343
        %v1392 = vadd.f32 %v1247, %v1344
        %v1393 = vadd.f32 %v1248, %v1345
        %v1394 = vadd.f32 %v1249, %v1346
        %v1395 = vadd.f32 %v1250, %v1347
        %v1396 = vadd.f32 %v1251, %v1348
        %v1397 = vadd.f32 %v1252, %v1349
        %v1398 = vadd.f32 %v1253, %v1350
        %v1399 = vadd.f32 %v1254, %v1351
        %v1400 = vadd.f32 %v1255, %v1352
        %v1401 = vadd.f32 %v1256, %v1353
        %v1402 = vadd.f32 %v1257, %v1354
        %v1403 = vadd.f32 %v1258, %v1355
        %v1404 = vadd.f32 %v1259, %v1356
        %v1405 = vadd.f32 %v1260, %v1357
        %v1406 = vadd.f32 %v1261, %v1358
        %v1407 = vadd.f32 %v1262, %v1359
        %v1408 = vadd.f32 %v1263, %v1360
        %v1409 = vadd.f32 %v1264, %v1361
        %v1410 = vadd.f32 %v1265, %v1362
        %v1411 = vadd.f32 %v1266, %v1363
        %v1412 = vmul.f32 %v1364, 0.125
        %v1413 = vmul.f32 %v1365, 0.125
        %v1414 = vmul.f32 %v1366, 0.125
        %v1415 = vmul.f32 %v1367, 0.125
        %v1416 = vmul.f32 %v1368, 0.125
        %v1417 = vmul.f32 %v1369, 0.125
        %v1418 = vmul.f32 %v1370, 0.125
        %v1419 = vmul.f32 %v1371, 0.125
        %v1420 = vmul.f32 %v1372, 0.125
        %v1421 = vmul.f32 %v1373, 0.125
        %v1422 = vmul.f32 %v1374, 0.125
        %v1423 = vmul.f32 %v1375, 0.125
        %v1424 = vmul.f32 %v1376, 0.125
        %v1425 = vmul.f32 %v1377, 0.125
        %v1426 = vmul.f32 %v1378, 0.125
        %v1427 = vmul.f32 %v1379, 0.125
        %v1428 = vmul.f32 %v1380, 0.125
        %v1429 = vmul.f32 %v1381, 0.125
        %v1430 = vmul.f32 %v1382, 0.125
        %v1431 = vmul.f32 %v1383, 0.125
        %v1432 = vmul.f32 %v1384, 0.125
        %v1433 = vmul.f32 %v1385, 0.125
        %v1434 = vmul.f32 %v1386, 0.125
        %v1435 = vmul.f32 %v1387, 0.125
        %v1436 = vmul.f32 %v1388, 0.125
        %v1437 = vmul.f32 %v1389, 0.125
        %v1438 = vmul.f32 %v1390, 0.125
        %v1439 = vmul.f32 %v1391, 0.125
        %v1440 = vmul.f32 %v1392, 0.125
        %v1441 = vmul.f32 %v1393, 0.125
        %v1442 = vmul.f32 %v1394, 0.125
        %v1443 = vmul.f32 %v1395, 0.125
        %v1444 = vmul.f32 %v1396, 0.125
        %v1445 = vmul.f32 %v1397, 0.125
        %v1446 = vmul.f32 %v1398, 0.125
        %v1447 = vmul.f32 %v1399, 0.125
        %v1448 = vmul.f32 %v1400, 0.125
        %v1449 = vmul.f32 %v1401, 0.125
        %v1450 = vmul.f32 %v1402, 0.125
        %v1451 = vmul.f32 %v1403, 0.125
        %v1452 = vmul.f32 %v1404, 0.125
        %v1453 = vmul.f32 %v1405, 0.125
        %v1454 = vmul.f32 %v1406, 0.125
        %v1455 = vmul.f32 %v1407, 0.125
        %v1456 = vmul.f32 %v1408, 0.125
        %v1457 = vmul.f32 %v1409, 0.125
        %v1458 = vmul.f32 %v1410, 0.125
        %v1459 = vmul.f32 %v1411, 0.125
        %v1460 = vmax.f32 %v1412, 1e-06
        %v1461 = vmax.f32 %v1413, 1e-06
        %v1462 = vmax.f32 %v1414, 1e-06
        %v1463 = vmax.f32 %v1415, 1e-06
        %v1464 = vmax.f32 %v1416, 1e-06
        %v1465 = vmax.f32 %v1417, 1e-06
        %v1466 = vmax.f32 %v1418, 1e-06
        %v1467 = vmax.f32 %v1419, 1e-06
        %v1468 = vmax.f32 %v1420, 1e-06
        %v1469 = vmax.f32 %v1421, 1e-06
        %v1470 = vmax.f32 %v1422, 1e-06
        %v1471 = vmax.f32 %v1423, 1e-06
        %v1472 = vmax.f32 %v1424, 1e-06
        %v1473 = vmax.f32 %v1425, 1e-06
        %v1474 = vmax.f32 %v1426, 1e-06
        %v1475 = vmax.f32 %v1427, 1e-06
        %v1476 = vmax.f32 %v1428, 1e-06
        %v1477 = vmax.f32 %v1429, 1e-06
        %v1478 = vmax.f32 %v1430, 1e-06
        %v1479 = vmax.f32 %v1431, 1e-06
        %v1480 = vmax.f32 %v1432, 1e-06
        %v1481 = vmax.f32 %v1433, 1e-06
        %v1482 = vmax.f32 %v1434, 1e-06
        %v1483 = vmax.f32 %v1435, 1e-06
        %v1484 = vmax.f32 %v1436, 1e-06
        %v1485 = vmax.f32 %v1437, 1e-06
        %v1486 = vmax.f32 %v1438, 1e-06
        %v1487 = vmax.f32 %v1439, 1e-06
        %v1488 = vmax.f32 %v1440, 1e-06
        %v1489 = vmax.f32 %v1441, 1e-06
        %v1490 = vmax.f32 %v1442, 1e-06
        %v1491 = vmax.f32 %v1443, 1e-06
        %v1492 = vmax.f32 %v1444, 1e-06
        %v1493 = vmax.f32 %v1445, 1e-06
        %v1494 = vmax.f32 %v1446, 1e-06
        %v1495 = vmax.f32 %v1447, 1e-06
        %v1496 = vmax.f32 %v1448, 1e-06
        %v1497 = vmax.f32 %v1449, 1e-06
        %v1498 = vmax.f32 %v1450, 1e-06
        %v1499 = vmax.f32 %v1451, 1e-06
        %v1500 = vmax.f32 %v1452, 1e-06
        %v1501 = vmax.f32 %v1453, 1e-06
        %v1502 = vmax.f32 %v1454, 1e-06
        %v1503 = vmax.f32 %v1455, 1e-06
        %v1504 = vmax.f32 %v1456, 1e-06
        %v1505 = vmax.f32 %v1457, 1e-06
        %v1506 = vmax.f32 %v1458, 1e-06
        %v1507 = vmax.f32 %v1459, 1e-06
        %v1508 = vmul.f32 %v1460, %v1460
        %v1509 = vmul.f32 %v1461, %v1461
        %v1510 = vmul.f32 %v1462, %v1462
        %v1511 = vmul.f32 %v1463, %v1463
        %v1512 = vmul.f32 %v1464, %v1464
        %v1513 = vmul.f32 %v1465, %v1465
        %v1514 = vmul.f32 %v1466, %v1466
        %v1515 = vmul.f32 %v1467, %v1467
        %v1516 = vmul.f32 %v1468, %v1468
        %v1517 = vmul.f32 %v1469, %v1469
        %v1518 = vmul.f32 %v1470, %v1470
        %v1519 = vmul.f32 %v1471, %v1471
        %v1520 = vmul.f32 %v1472, %v1472
        %v1521 = vmul.f32 %v1473, %v1473
        %v1522 = vmul.f32 %v1474, %v1474
        %v1523 = vmul.f32 %v1475, %v1475
        %v1524 = vmul.f32 %v1476, %v1476
        %v1525 = vmul.f32 %v1477, %v1477
        %v1526 = vmul.f32 %v1478, %v1478
        %v1527 = vmul.f32 %v1479, %v1479
        %v1528 = vmul.f32 %v1480, %v1480
        %v1529 = vmul.f32 %v1481, %v1481
        %v1530 = vmul.f32 %v1482, %v1482
        %v1531 = vmul.f32 %v1483, %v1483
        %v1532 = vmul.f32 %v1484, %v1484
        %v1533 = vmul.f32 %v1485, %v1485
        %v1534 = vmul.f32 %v1486, %v1486
        %v1535 = vmul.f32 %v1487, %v1487
        %v1536 = vmul.f32 %v1488, %v1488
        %v1537 = vmul.f32 %v1489, %v1489
        %v1538 = vmul.f32 %v1490, %v1490
        %v1539 = vmul.f32 %v1491, %v1491
        %v1540 = vmul.f32 %v1492, %v1492
        %v1541 = vmul.f32 %v1493, %v1493
        %v1542 = vmul.f32 %v1494, %v1494
        %v1543 = vmul.f32 %v1495, %v1495
        %v1544 = vmul.f32 %v1496, %v1496
        %v1545 = vmul.f32 %v1497, %v1497
        %v1546 = vmul.f32 %v1498, %v1498
        %v1547 = vmul.f32 %v1499, %v1499
        %v1548 = vmul.f32 %v1500, %v1500
        %v1549 = vmul.f32 %v1501, %v1501
        %v1550 = vmul.f32 %v1502, %v1502
        %v1551 = vmul.f32 %v1503, %v1503
        %v1552 = vmul.f32 %v1504, %v1504
        %v1553 = vmul.f32 %v1505, %v1505
        %v1554 = vmul.f32 %v1506, %v1506
        %v1555 = vmul.f32 %v1507, %v1507
        %v1556 = vmul.f32 %v1508, %v1460
        %v1557 = vmul.f32 %v1509, %v1461
        %v1558 = vmul.f32 %v1510, %v1462
        %v1559 = vmul.f32 %v1511, %v1463
        %v1560 = vmul.f32 %v1512, %v1464
        %v1561 = vmul.f32 %v1513, %v1465
        %v1562 = vmul.f32 %v1514, %v1466
        %v1563 = vmul.f32 %v1515, %v1467
        %v1564 = vmul.f32 %v1516, %v1468
        %v1565 = vmul.f32 %v1517, %v1469
        %v1566 = vmul.f32 %v1518, %v1470
        %v1567 = vmul.f32 %v1519, %v1471
        %v1568 = vmul.f32 %v1520, %v1472
        %v1569 = vmul.f32 %v1521, %v1473
        %v1570 = vmul.f32 %v1522, %v1474
        %v1571 = vmul.f32 %v1523, %v1475
        %v1572 = vmul.f32 %v1524, %v1476
        %v1573 = vmul.f32 %v1525, %v1477
        %v1574 = vmul.f32 %v1526, %v1478
        %v1575 = vmul.f32 %v1527, %v1479
        %v1576 = vmul.f32 %v1528, %v1480
        %v1577 = vmul.f32 %v1529, %v1481
        %v1578 = vmul.f32 %v1530, %v1482
        %v1579 = vmul.f32 %v1531, %v1483
        %v1580 = vmul.f32 %v1532, %v1484
        %v1581 = vmul.f32 %v1533, %v1485
        %v1582 = vmul.f32 %v1534, %v1486
        %v1583 = vmul.f32 %v1535, %v1487
        %v1584 = vmul.f32 %v1536, %v1488
        %v1585 = vmul.f32 %v1537, %v1489
        %v1586 = vmul.f32 %v1538, %v1490
        %v1587 = vmul.f32 %v1539, %v1491
        %v1588 = vmul.f32 %v1540, %v1492
        %v1589 = vmul.f32 %v1541, %v1493
        %v1590 = vmul.f32 %v1542, %v1494
        %v1591 = vmul.f32 %v1543, %v1495
        %v1592 = vmul.f32 %v1544, %v1496
        %v1593 = vmul.f32 %v1545, %v1497
        %v1594 = vmul.f32 %v1546, %v1498
        %v1595 = vmul.f32 %v1547, %v1499
        %v1596 = vmul.f32 %v1548, %v1500
        %v1597 = vmul.f32 %v1549, %v1501
        %v1598 = vmul.f32 %v1550, %v1502
        %v1599 = vmul.f32 %v1551, %v1503
        %v1600 = vmul.f32 %v1552, %v1504
        %v1601 = vmul.f32 %v1553, %v1505
        %v1602 = vmul.f32 %v1554, %v1506
        %v1603 = vmul.f32 %v1555, %v1507
        %1604 = vst [vmem:[#allocation2] sm:$0xff] %v1556
        %1605 = vst [vmem:[#allocation2 + $0x8] sm:$0xff] %v1557
        %1606 = vst [vmem:[#allocation2 + $0x10] sm:$0xff] %v1558
        %1607 = vst [vmem:[#allocation2 + $0x18] sm:$0xff] %v1559
        %1608 = vst [vmem:[#allocation2 + $0x20] sm:$0xff] %v1560
        %1609 = vst [vmem:[#allocation2 + $0x28] sm:$0xff] %v1561
        %1610 = vst [vmem:[#allocation2 + $0x30] sm:$0xff] %v1562
        %1611 = vst [vmem:[#allocation2 + $0x38] sm:$0xff] %v1563
        %1612 = vst [vmem:[#allocation2 + $0x40] sm:$0xff] %v1564
        %1613 = vst [vmem:[#allocation2 + $0x48] sm:$0xff] %v1565
        %1614 = vst [vmem:[#allocation2 + $0x50] sm:$0xff] %v1566
        %1615 = vst [vmem:[#allocation2 + $0x58] sm:$0xff] %v1567
        %1616 = vst [vmem:[#allocation2 + $0x60] sm:$0xff] %v1568
        %1617 = vst [vmem:[#allocation2 + $0x68] sm:$0xff] %v1569
        %1618 = vst [vmem:[#allocation2 + $0x70] sm:$0xff] %v1570
        %1619 = vst [vmem:[#allocation2 + $0x78] sm:$0xff] %v1571
        %1620 = vst [vmem:[#allocation2 + $0x80] sm:$0xff] %v1572
        %1621 = vst [vmem:[#allocation2 + $0x88] sm:$0xff] %v1573
        %1622 = vst [vmem:[#allocation2 + $0x90] sm:$0xff] %v1574
        %1623 = vst [vmem:[#allocation2 + $0x98] sm:$0xff] %v1575
        %1624 = vst [vmem:[#allocation2 + $0xa0] sm:$0xff] %v1576
        %1625 = vst [vmem:[#allocation2 + $0xa8] sm:$0xff] %v1577
        %1626 = vst [vmem:[#allocation2 + $0xb0] sm:$0xff] %v1578
        %1627 = vst [vmem:[#allocation2 + $0xb8] sm:$0xff] %v1579
        %1628 = vst [vmem:[#allocation2 + $0xc0] sm:$0xff] %v1580
        %1629 = vst [vmem:[#allocation2 + $0xc8] sm:$0xff] %v1581
        %1630 = vst [vmem:[#allocation2 + $0xd0] sm:$0xff] %v1582
        %1631 = vst [vmem:[#allocation2 + $0xd8] sm:$0xff] %v1583
        %1632 = vst [vmem:[#allocation2 + $0xe0] sm:$0xff] %v1584
        %1633 = vst [vmem:[#allocation2 + $0xe8] sm:$0xff] %v1585
        %1634 = vst [vmem:[#allocation2 + $0xf0] sm:$0xff] %v1586
        %1635 = vst [vmem:[#allocation2 + $0xf8] sm:$0xff] %v1587
        %1636 = vst [vmem:[#allocation2 + $0x100] sm:$0xff] %v1588
        %1637 = vst [vmem:[#allocation2 + $0x108] sm:$0xff] %v1589
        %1638 = vst [vmem:[#allocation2 + $0x110] sm:$0xff] %v1590
        %1639 = vst [vmem:[#allocation2 + $0x118] sm:$0xff] %v1591
        %1640 = vst [vmem:[#allocation2 + $0x120] sm:$0xff] %v1592
        %1641 = vst [vmem:[#allocation2 + $0x128] sm:$0xff] %v1593
        %1642 = vst [vmem:[#allocation2 + $0x130] sm:$0xff] %v1594
        %1643 = vst [vmem:[#allocation2 + $0x138] sm:$0xff] %v1595
        %1644 = vst [vmem:[#allocation2 + $0x140] sm:$0xff] %v1596
        %1645 = vst [vmem:[#allocation2 + $0x148] sm:$0xff] %v1597
        %1646 = vst [vmem:[#allocation2 + $0x150] sm:$0xff] %v1598
        %1647 = vst [vmem:[#allocation2 + $0x158] sm:$0xff] %v1599
        %1648 = vst [vmem:[#allocation2 + $0x160] sm:$0xff] %v1600
        %1649 = vst [vmem:[#allocation2 + $0x168] sm:$0xff] %v1601
        %1650 = vst [vmem:[#allocation2 + $0x170] sm:$0xff] %v1602
        %1651 = vst [vmem:[#allocation2 + $0x178] sm:$0xff] %v1603
        %v1652 = vld [vmem:[#allocation2] ss:$3 sm:$0xff]
        %s1653 = scalar_lea.vmem [#allocation2], 24
        %v1654 = vld [vmem:[%s1653] ss:$3 sm:$0xff]
        %s1655 = scalar_lea.vmem [#allocation2], 48
        %v1656 = vld [vmem:[%s1655] ss:$3 sm:$0xff]
        %s1657 = scalar_lea.vmem [#allocation2], 72
        %v1658 = vld [vmem:[%s1657] ss:$3 sm:$0xff]
        %s1659 = scalar_lea.vmem [#allocation2], 96
        %v1660 = vld [vmem:[%s1659] ss:$3 sm:$0xff]
        %s1661 = scalar_lea.vmem [#allocation2], 120
        %v1662 = vld [vmem:[%s1661] ss:$3 sm:$0xff]
        %s1663 = scalar_lea.vmem [#allocation2], 144
        %v1664 = vld [vmem:[%s1663] ss:$3 sm:$0xff]
        %s1665 = scalar_lea.vmem [#allocation2], 168
        %v1666 = vld [vmem:[%s1665] ss:$3 sm:$0xff]
        %s1667 = scalar_lea.vmem [#allocation2], 192
        %v1668 = vld [vmem:[%s1667] ss:$3 sm:$0xff]
        %s1669 = scalar_lea.vmem [#allocation2], 216
        %v1670 = vld [vmem:[%s1669] ss:$3 sm:$0xff]
        %s1671 = scalar_lea.vmem [#allocation2], 240
        %v1672 = vld [vmem:[%s1671] ss:$3 sm:$0xff]
        %s1673 = scalar_lea.vmem [#allocation2], 264
        %v1674 = vld [vmem:[%s1673] ss:$3 sm:$0xff]
        %s1675 = scalar_lea.vmem [#allocation2], 288
        %v1676 = vld [vmem:[%s1675] ss:$3 sm:$0xff]
        %s1677 = scalar_lea.vmem [#allocation2], 312
        %v1678 = vld [vmem:[%s1677] ss:$3 sm:$0xff]
        %s1679 = scalar_lea.vmem [#allocation2], 336
        %v1680 = vld [vmem:[%s1679] ss:$3 sm:$0xff]
        %s1681 = scalar_lea.vmem [#allocation2], 360
        %v1682 = vld [vmem:[%s1681] ss:$3 sm:$0xff]
        %s1683 = scalar_lea.vmem [#allocation2], 1
        %v1684 = vld [vmem:[%s1683] ss:$3 sm:$0xff]
        %s1685 = scalar_lea.vmem [#allocation2], 25
        %v1686 = vld [vmem:[%s1685] ss:$3 sm:$0xff]
        %s1687 = scalar_lea.vmem [#allocation2], 49
        %v1688 = vld [vmem:[%s1687] ss:$3 sm:$0xff]
        %s1689 = scalar_lea.vmem [#allocation2], 73
        %v1690 = vld [vmem:[%s1689] ss:$3 sm:$0xff]
        %s1691 = scalar_lea.vmem [#allocation2], 97
        %v1692 = vld [vmem:[%s1691] ss:$3 sm:$0xff]
        %s1693 = scalar_lea.vmem [#allocation2], 121
        %v1694 = vld [vmem:[%s1693] ss:$3 sm:$0xff]
        %s1695 = scalar_lea.vmem [#allocation2], 145
        %v1696 = vld [vmem:[%s1695] ss:$3 sm:$0xff]
        %s1697 = scalar_lea.vmem [#allocation2], 169
        %v1698 = vld [vmem:[%s1697] ss:$3 sm:$0xff]
        %s1699 = scalar_lea.vmem [#allocation2], 193
        %v1700 = vld [vmem:[%s1699] ss:$3 sm:$0xff]
        %s1701 = scalar_lea.vmem [#allocation2], 217
        %v1702 = vld [vmem:[%s1701] ss:$3 sm:$0xff]
        %s1703 = scalar_lea.vmem [#allocation2], 241
        %v1704 = vld [vmem:[%s1703] ss:$3 sm:$0xff]
        %s1705 = scalar_lea.vmem [#allocation2], 265
        %v1706 = vld [vmem:[%s1705] ss:$3 sm:$0xff]
        %s1707 = scalar_lea.vmem [#allocation2], 289
        %v1708 = vld [vmem:[%s1707] ss:$3 sm:$0xff]
        %s1709 = scalar_lea.vmem [#allocation2], 313
        %v1710 = vld [vmem:[%s1709] ss:$3 sm:$0xff]
        %s1711 = scalar_lea.vmem [#allocation2], 337
        %v1712 = vld [vmem:[%s1711] ss:$3 sm:$0xff]
        %s1713 = scalar_lea.vmem [#allocation2], 361
        %v1714 = vld [vmem:[%s1713] ss:$3 sm:$0xff]
        %v1715 = vadd.f32 %v1652, %v1684
        %v1716 = vadd.f32 %v1654, %v1686
        %v1717 = vadd.f32 %v1656, %v1688
        %v1718 = vadd.f32 %v1658, %v1690
        %v1719 = vadd.f32 %v1660, %v1692
        %v1720 = vadd.f32 %v1662, %v1694
        %v1721 = vadd.f32 %v1664, %v1696
        %v1722 = vadd.f32 %v1666, %v1698
        %v1723 = vadd.f32 %v1668, %v1700
        %v1724 = vadd.f32 %v1670, %v1702
        %v1725 = vadd.f32 %v1672, %v1704
        %v1726 = vadd.f32 %v1674, %v1706
        %v1727 = vadd.f32 %v1676, %v1708
        %v1728 = vadd.f32 %v1678, %v1710
        %v1729 = vadd.f32 %v1680, %v1712
        %v1730 = vadd.f32 %v1682, %v1714
        %s1731 = scalar_lea.vmem [#allocation2], 2
        %v1732 = vld [vmem:[%s1731] ss:$3 sm:$0xff]
        %s1733 = scalar_lea.vmem [#allocation2], 26
        %v1734 = vld [vmem:[%s1733] ss:$3 sm:$0xff]
        %s1735 = scalar_lea.vmem [#allocation2], 50
        %v1736 = vld [vmem:[%s1735] ss:$3 sm:$0xff]
        %s1737 = scalar_lea.vmem [#allocation2], 74
        %v1738 = vld [vmem:[%s1737] ss:$3 sm:$0xff]
        %s1739 = scalar_lea.vmem [#allocation2], 98
        %v1740 = vld [vmem:[%s1739] ss:$3 sm:$0xff]
        %s1741 = scalar_lea.vmem [#allocation2], 122
        %v1742 = vld [vmem:[%s1741] ss:$3 sm:$0xff]
        %s1743 = scalar_lea.vmem [#allocation2], 146
        %v1744 = vld [vmem:[%s1743] ss:$3 sm:$0xff]
        %s1745 = scalar_lea.vmem [#allocation2], 170
        %v1746 = vld [vmem:[%s1745] ss:$3 sm:$0xff]
        %s1747 = scalar_lea.vmem [#allocation2], 194
        %v1748 = vld [vmem:[%s1747] ss:$3 sm:$0xff]
        %s1749 = scalar_lea.vmem [#allocation2], 218
        %v1750 = vld [vmem:[%s1749] ss:$3 sm:$0xff]
        %s1751 = scalar_lea.vmem [#allocation2], 242
        %v1752 = vld [vmem:[%s1751] ss:$3 sm:$0xff]
        %s1753 = scalar_lea.vmem [#allocation2], 266
        %v1754 = vld [vmem:[%s1753] ss:$3 sm:$0xff]
        %s1755 = scalar_lea.vmem [#allocation2], 290
        %v1756 = vld [vmem:[%s1755] ss:$3 sm:$0xff]
        %s1757 = scalar_lea.vmem [#allocation2], 314
        %v1758 = vld [vmem:[%s1757] ss:$3 sm:$0xff]
        %s1759 = scalar_lea.vmem [#allocation2], 338
        %v1760 = vld [vmem:[%s1759] ss:$3 sm:$0xff]
        %s1761 = scalar_lea.vmem [#allocation2], 362
        %v1762 = vld [vmem:[%s1761] ss:$3 sm:$0xff]
        %v1763 = vadd.f32 %v1715, %v1732
        %v1764 = vadd.f32 %v1716, %v1734
        %v1765 = vadd.f32 %v1717, %v1736
        %v1766 = vadd.f32 %v1718, %v1738
        %v1767 = vadd.f32 %v1719, %v1740
        %v1768 = vadd.f32 %v1720, %v1742
        %v1769 = vadd.f32 %v1721, %v1744
        %v1770 = vadd.f32 %v1722, %v1746
        %v1771 = vadd.f32 %v1723, %v1748
        %v1772 = vadd.f32 %v1724, %v1750
        %v1773 = vadd.f32 %v1725, %v1752
        %v1774 = vadd.f32 %v1726, %v1754
        %v1775 = vadd.f32 %v1727, %v1756
        %v1776 = vadd.f32 %v1728, %v1758
        %v1777 = vadd.f32 %v1729, %v1760
        %v1778 = vadd.f32 %v1730, %v1762
        %v1779 = vmul.f32 %v1763, 0.33333334
        %v1780 = vmul.f32 %v1764, 0.33333334
        %v1781 = vmul.f32 %v1765, 0.33333334
        %v1782 = vmul.f32 %v1766, 0.33333334
        %v1783 = vmul.f32 %v1767, 0.33333334
        %v1784 = vmul.f32 %v1768, 0.33333334
        %v1785 = vmul.f32 %v1769, 0.33333334
        %v1786 = vmul.f32 %v1770, 0.33333334
        %v1787 = vmul.f32 %v1771, 0.33333334
        %v1788 = vmul.f32 %v1772, 0.33333334
        %v1789 = vmul.f32 %v1773, 0.33333334
        %v1790 = vmul.f32 %v1774, 0.33333334
        %v1791 = vmul.f32 %v1775, 0.33333334
        %v1792 = vmul.f32 %v1776, 0.33333334
        %v1793 = vmul.f32 %v1777, 0.33333334
        %v1794 = vmul.f32 %v1778, 0.33333334
        %v1795 = vlog2.pop %v1779
        %v1796 = vmul.f32 %v1795, 0.6931472
        %v1797 = vlog2.pop %v1780
        %v1798 = vmul.f32 %v1797, 0.6931472
        %v1799 = vlog2.pop %v1781
        %v1800 = vmul.f32 %v1799, 0.6931472
        %v1801 = vlog2.pop %v1782
        %v1802 = vmul.f32 %v1801, 0.6931472
        %v1803 = vlog2.pop %v1783
        %v1804 = vmul.f32 %v1803, 0.6931472
        %v1805 = vlog2.pop %v1784
        %v1806 = vmul.f32 %v1805, 0.6931472
        %v1807 = vlog2.pop %v1785
        %v1808 = vmul.f32 %v1807, 0.6931472
        %v1809 = vlog2.pop %v1786
        %v1810 = vmul.f32 %v1809, 0.6931472
        %v1811 = vlog2.pop %v1787
        %v1812 = vmul.f32 %v1811, 0.6931472
        %v1813 = vlog2.pop %v1788
        %v1814 = vmul.f32 %v1813, 0.6931472
        %v1815 = vlog2.pop %v1789
        %v1816 = vmul.f32 %v1815, 0.6931472
        %v1817 = vlog2.pop %v1790
        %v1818 = vmul.f32 %v1817, 0.6931472
        %v1819 = vlog2.pop %v1791
        %v1820 = vmul.f32 %v1819, 0.6931472
        %v1821 = vlog2.pop %v1792
        %v1822 = vmul.f32 %v1821, 0.6931472
        %v1823 = vlog2.pop %v1793
        %v1824 = vmul.f32 %v1823, 0.6931472
        %v1825 = vlog2.pop %v1794
        %v1826 = vmul.f32 %v1825, 0.6931472
        %v1827 = vmul.f32 %v1796, 0.33333334
        %v1828 = vmul.f32 %v1798, 0.33333334
        %v1829 = vmul.f32 %v1800, 0.33333334
        %v1830 = vmul.f32 %v1802, 0.33333334
        %v1831 = vmul.f32 %v1804, 0.33333334
        %v1832 = vmul.f32 %v1806, 0.33333334
        %v1833 = vmul.f32 %v1808, 0.33333334
        %v1834 = vmul.f32 %v1810, 0.33333334
        %v1835 = vmul.f32 %v1812, 0.33333334
        %v1836 = vmul.f32 %v1814, 0.33333334
        %v1837 = vmul.f32 %v1816, 0.33333334
        %v1838 = vmul.f32 %v1818, 0.33333334
        %v1839 = vmul.f32 %v1820, 0.33333334
        %v1840 = vmul.f32 %v1822, 0.33333334
        %v1841 = vmul.f32 %v1824, 0.33333334
        %v1842 = vmul.f32 %v1826, 0.33333334
        %v1843 = vmul.f32 %v1827, 1.442695
        %v1844 = vpow.pop %v1843
        %v1845 = vmul.f32 %v1828, 1.442695
        %v1846 = vpow.pop %v1845
        %v1847 = vmul.f32 %v1829, 1.442695
        %v1848 = vpow.pop %v1847
        %v1849 = vmul.f32 %v1830, 1.442695
        %v1850 = vpow.pop %v1849
        %v1851 = vmul.f32 %v1831, 1.442695
        %v1852 = vpow.pop %v1851
        %v1853 = vmul.f32 %v1832, 1.442695
        %v1854 = vpow.pop %v1853
        %v1855 = vmul.f32 %v1833, 1.442695
        %v1856 = vpow.pop %v1855
        %v1857 = vmul.f32 %v1834, 1.442695
        %v1858 = vpow.pop %v1857
        %v1859 = vmul.f32 %v1835, 1.442695
        %v1860 = vpow.pop %v1859
        %v1861 = vmul.f32 %v1836, 1.442695
        %v1862 = vpow.pop %v1861
        %v1863 = vmul.f32 %v1837, 1.442695
        %v1864 = vpow.pop %v1863
        %v1865 = vmul.f32 %v1838, 1.442695
        %v1866 = vpow.pop %v1865
        %v1867 = vmul.f32 %v1839, 1.442695
        %v1868 = vpow.pop %v1867
        %v1869 = vmul.f32 %v1840, 1.442695
        %v1870 = vpow.pop %v1869
        %v1871 = vmul.f32 %v1841, 1.442695
        %v1872 = vpow.pop %v1871
        %v1873 = vmul.f32 %v1842, 1.442695
        %v1874 = vpow.pop %v1873
        %v1875 = vpack.c.bf16 %v1846, %v1844
        %v1876 = vpack.c.bf16 %v1850, %v1848
        %v1877 = vpack.c.bf16 %v1854, %v1852
        %v1878 = vpack.c.bf16 %v1858, %v1856
        %v1879 = vpack.c.bf16 %v1862, %v1860
        %v1880 = vpack.c.bf16 %v1866, %v1864
        %v1881 = vpack.c.bf16 %v1870, %v1868
        %v1882 = vpack.c.bf16 %v1874, %v1872
        %v1883 = vld [vmem:[#allocation6] sm:$0xf]
        %v1884 = vld [vmem:[#allocation6 + $0x4] sm:$0xf]
        %v1885 = vld [vmem:[#allocation6 + $0x8] sm:$0xf]
        %v1886 = vld [vmem:[#allocation6 + $0xc] sm:$0xf]
        %v1887 = vld [vmem:[#allocation6 + $0x10] sm:$0xf]
        %v1888 = vld [vmem:[#allocation6 + $0x14] sm:$0xf]
        %v1889 = vld [vmem:[#allocation6 + $0x18] sm:$0xf]
        %v1890 = vld [vmem:[#allocation6 + $0x1c] sm:$0xf]
        %v1891 = vld [vmem:[#allocation6 + $0x20] sm:$0xf]
        %v1892 = vld [vmem:[#allocation6 + $0x24] sm:$0xf]
        %v1893 = vld [vmem:[#allocation6 + $0x28] sm:$0xf]
        %v1894 = vld [vmem:[#allocation6 + $0x2c] sm:$0xf]
        %v1895 = vld [vmem:[#allocation6 + $0x30] sm:$0xf]
        %v1896 = vld [vmem:[#allocation6 + $0x34] sm:$0xf]
        %v1897 = vld [vmem:[#allocation6 + $0x38] sm:$0xf]
        %v1898 = vld [vmem:[#allocation6 + $0x3c] sm:$0xf]
        %v1899 = vld [vmem:[#allocation8] sm:$0x1]
        %v1901 = vlaneseq
        %v1902 = vshrl.u32 %v1901, 7
        %v1903 = vsub.s32 0, %v1902
        %v1904 = vrot.slane %v1899, %v1903
        %v1922 = vunpack.c.l.b16 %v1883
        %v1923 = vunpack.c.l.b16 %v1884
        %v1924 = vunpack.c.l.b16 %v1885
        %v1925 = vunpack.c.l.b16 %v1886
        %v1926 = vunpack.c.l.b16 %v1887
        %v1927 = vunpack.c.l.b16 %v1888
        %v1928 = vunpack.c.l.b16 %v1889
        %v1929 = vunpack.c.l.b16 %v1890
        %v1930 = vunpack.c.l.b16 %v1891
        %v1931 = vunpack.c.l.b16 %v1892
        %v1932 = vunpack.c.l.b16 %v1893
        %v1933 = vunpack.c.l.b16 %v1894
        %v1934 = vunpack.c.l.b16 %v1895
        %v1935 = vunpack.c.l.b16 %v1896
        %v1936 = vunpack.c.l.b16 %v1897
        %v1937 = vunpack.c.l.b16 %v1898
        %v1938 = vpack.c.b16 %v1923, %v1922
        %v1939 = vpack.c.b16 %v1925, %v1924
        %v1940 = vpack.c.b16 %v1927, %v1926
        %v1941 = vpack.c.b16 %v1929, %v1928
        %v1942 = vpack.c.b16 %v1931, %v1930
        %v1943 = vpack.c.b16 %v1933, %v1932
        %v1944 = vpack.c.b16 %v1935, %v1934
        %v1945 = vpack.c.b16 %v1937, %v1936
        %1954 = vmatprep.subr.bf16.mxu0 0
        %1955 = vmatpush1.bf16.msra.mxu0 %v1945
        %1956 = vmatprep.subr.bf16.mxu0 0
        %1957 = vmatpush1.bf16.msra.mxu0 %v1944
        %1958 = vmatprep.subr.bf16.mxu0 0
        %1959 = vmatpush1.bf16.msra.mxu0 %v1943
        %1960 = vmatprep.subr.bf16.mxu0 0
        %1961 = vmatpush1.bf16.msra.mxu0 %v1942
        %1962 = vmatprep.subr.bf16.mxu0 0
        %1963 = vmatpush1.bf16.msra.mxu0 %v1941
        %1964 = vmatprep.subr.bf16.mxu0 0
        %1965 = vmatpush1.bf16.msra.mxu0 %v1940
        %1966 = vmatprep.subr.bf16.mxu0 0
        %1967 = vmatpush1.bf16.msra.mxu0 %v1939
        %1968 = vmatprep.subr.bf16.mxu0 0
        %1969 = vmatpush1.bf16.msra.mxu0 %v1938
        %1970 = vmatprep.subr.bf16.mxu0 0
        %1971 = vmatpush2.bf16.msra.mxu0 0
        %1972 = vmatprep.subr.bf16.mxu0 0
        %1973 = vmatpush2.bf16.msra.mxu0 0
        %1974 = vmatprep.subr.bf16.mxu0 0
        %1975 = vmatpush2.bf16.msra.mxu0 0
        %1976 = vmatprep.subr.bf16.mxu0 0
        %1977 = vmatpush2.bf16.msra.mxu0 0
        %1978 = vmatprep.subr.bf16.mxu0 0
        %1979 = vmatpush2.bf16.msra.mxu0 0
        %1980 = vmatprep.subr.bf16.mxu0 0
        %1981 = vmatpush2.bf16.msra.mxu0 0
        %1982 = vmatprep.subr.bf16.mxu0 0
        %1983 = vmatpush2.bf16.msra.mxu0 0
        %1984 = vmatprep.subr.bf16.mxu0 0
        %1985 = vmatpush2.bf16.msra.mxu0 0
        %1986 = vmatprep.mubr.bf16.mxu0 0
        %1987 = vmatmul.mubr.bf16.gmra.mxu0 %v1875
        %v1988 = vpop.f32.mrf.mxu0
        %v1989 = vadd.f32 %v1904, %v1988
        %v1990 = vpop.f32.mrf.mxu0
        %v1991 = vpop.f32.mrf.mxu0
        %v1992 = vadd.f32 %v1904, %v1991
        %v1993 = vpop.f32.mrf.mxu0
        %1994 = vmatprep.mubr.bf16.mxu0 0
        %1995 = vmatmul.mubr.bf16.gmra.mxu0 %v1876
        %v1996 = vpop.f32.mrf.mxu0
        %v1997 = vadd.f32 %v1904, %v1996
        %v1998 = vpop.f32.mrf.mxu0
        %v1999 = vpop.f32.mrf.mxu0
        %v2000 = vadd.f32 %v1904, %v1999
        %v2001 = vpop.f32.mrf.mxu0
        %2002 = vmatprep.mubr.bf16.mxu0 0
        %2003 = vmatmul.mubr.bf16.gmra.mxu0 %v1877
        %v2004 = vpop.f32.mrf.mxu0
        %v2005 = vadd.f32 %v1904, %v2004
        %v2006 = vpop.f32.mrf.mxu0
        %v2007 = vpop.f32.mrf.mxu0
        %v2008 = vadd.f32 %v1904, %v2007
        %v2009 = vpop.f32.mrf.mxu0
        %2010 = vmatprep.mubr.bf16.mxu0 0
        %2011 = vmatmul.mubr.bf16.gmra.mxu0 %v1878
        %v2012 = vpop.f32.mrf.mxu0
        %v2013 = vadd.f32 %v1904, %v2012
        %v2014 = vpop.f32.mrf.mxu0
        %v2015 = vpop.f32.mrf.mxu0
        %v2016 = vadd.f32 %v1904, %v2015
        %v2017 = vpop.f32.mrf.mxu0
        %2018 = vmatprep.mubr.bf16.mxu0 0
        %2019 = vmatmul.mubr.bf16.gmra.mxu0 %v1879
        %v2020 = vpop.f32.mrf.mxu0
        %v2021 = vadd.f32 %v1904, %v2020
        %v2022 = vpop.f32.mrf.mxu0
        %v2023 = vpop.f32.mrf.mxu0
        %v2024 = vadd.f32 %v1904, %v2023
        %v2025 = vpop.f32.mrf.mxu0
        %2026 = vmatprep.mubr.bf16.mxu0 0
        %2027 = vmatmul.mubr.bf16.gmra.mxu0 %v1880
        %v2028 = vpop.f32.mrf.mxu0
        %v2029 = vadd.f32 %v1904, %v2028
        %v2030 = vpop.f32.mrf.mxu0
        %v2031 = vpop.f32.mrf.mxu0
        %v2032 = vadd.f32 %v1904, %v2031
        %v2033 = vpop.f32.mrf.mxu0
        %2034 = vmatprep.mubr.bf16.mxu0 0
        %2035 = vmatmul.mubr.bf16.gmra.mxu0 %v1881
        %v2036 = vpop.f32.mrf.mxu0
        %v2037 = vadd.f32 %v1904, %v2036
        %v2038 = vpop.f32.mrf.mxu0
        %v2039 = vpop.f32.mrf.mxu0
        %v2040 = vadd.f32 %v1904, %v2039
        %v2041 = vpop.f32.mrf.mxu0
        %2042 = vmatprep.mubr.bf16.mxu0 0
        %2043 = vmatmul.mubr.bf16.gmra.mxu0 %v1882
        %v2044 = vpop.f32.mrf.mxu0
        %v2045 = vadd.f32 %v1904, %v2044
        %v2046 = vpop.f32.mrf.mxu0
        %v2047 = vpop.f32.mrf.mxu0
        %v2048 = vadd.f32 %v1904, %v2047
        %v2049 = vpop.f32.mrf.mxu0
        %2050 = vdwg.mxu0
        %v2051 = vmax.f32 %v1989, 0.0
        %v2052 = vmax.f32 %v1992, 0.0
        %v2053 = vmax.f32 %v1997, 0.0
        %v2054 = vmax.f32 %v2000, 0.0
        %v2055 = vmax.f32 %v2005, 0.0
        %v2056 = vmax.f32 %v2008, 0.0
        %v2057 = vmax.f32 %v2013, 0.0
        %v2058 = vmax.f32 %v2016, 0.0
        %v2059 = vmax.f32 %v2021, 0.0
        %v2060 = vmax.f32 %v2024, 0.0
        %v2061 = vmax.f32 %v2029, 0.0
        %v2062 = vmax.f32 %v2032, 0.0
        %v2063 = vmax.f32 %v2037, 0.0
        %v2064 = vmax.f32 %v2040, 0.0
        %v2065 = vmax.f32 %v2045, 0.0
        %v2066 = vmax.f32 %v2048, 0.0
        %v2067 = vpack.c.bf16 %v2052, %v2051
        %v2068 = vpack.c.bf16 %v2054, %v2053
        %v2069 = vpack.c.bf16 %v2056, %v2055
        %v2070 = vpack.c.bf16 %v2058, %v2057
        %v2071 = vpack.c.bf16 %v2060, %v2059
        %v2072 = vpack.c.bf16 %v2062, %v2061
        %v2073 = vpack.c.bf16 %v2064, %v2063
        %v2074 = vpack.c.bf16 %v2066, %v2065
        %v2075 = vld [vmem:[#allocation9] sm:$0xf]
        %v2076 = vld [vmem:[#allocation9 + $0x4] sm:$0xf]
        %v2077 = vld [vmem:[#allocation9 + $0x8] sm:$0xf]
        %v2078 = vld [vmem:[#allocation9 + $0xc] sm:$0xf]
        %v2079 = vld [vmem:[#allocation9 + $0x10] sm:$0xf]
        %v2080 = vld [vmem:[#allocation9 + $0x14] sm:$0xf]
        %v2081 = vld [vmem:[#allocation9 + $0x18] sm:$0xf]
        %v2082 = vld [vmem:[#allocation9 + $0x1c] sm:$0xf]
        %v2083 = vld [vmem:[#allocation9 + $0x20] sm:$0xf]
        %v2084 = vld [vmem:[#allocation9 + $0x24] sm:$0xf]
        %v2085 = vld [vmem:[#allocation9 + $0x28] sm:$0xf]
        %v2086 = vld [vmem:[#allocation9 + $0x2c] sm:$0xf]
        %v2087 = vld [vmem:[#allocation9 + $0x30] sm:$0xf]
        %v2088 = vld [vmem:[#allocation9 + $0x34] sm:$0xf]
        %v2089 = vld [vmem:[#allocation9 + $0x38] sm:$0xf]
        %v2090 = vld [vmem:[#allocation9 + $0x3c] sm:$0xf]
        %v2091 = vld [vmem:[#allocation11] sm:$0x1]
        %v2093 = vlaneseq
        %v2094 = vshrl.u32 %v2093, 7
        %v2095 = vsub.s32 0, %v2094
        %v2096 = vrot.slane %v2091, %v2095
        %v2114 = vunpack.c.l.b16 %v2075
        %v2115 = vunpack.c.l.b16 %v2076
        %v2116 = vunpack.c.l.b16 %v2077
        %v2117 = vunpack.c.l.b16 %v2078
        %v2118 = vunpack.c.l.b16 %v2079
        %v2119 = vunpack.c.l.b16 %v2080
        %v2120 = vunpack.c.l.b16 %v2081
        %v2121 = vunpack.c.l.b16 %v2082
        %v2122 = vunpack.c.l.b16 %v2083
        %v2123 = vunpack.c.l.b16 %v2084
        %v2124 = vunpack.c.l.b16 %v2085
        %v2125 = vunpack.c.l.b16 %v2086
        %v2126 = vunpack.c.l.b16 %v2087
        %v2127 = vunpack.c.l.b16 %v2088
        %v2128 = vunpack.c.l.b16 %v2089
        %v2129 = vunpack.c.l.b16 %v2090
        %v2130 = vpack.c.b16 %v2115, %v2114
        %v2131 = vpack.c.b16 %v2117, %v2116
        %v2132 = vpack.c.b16 %v2119, %v2118
        %v2133 = vpack.c.b16 %v2121, %v2120
        %v2134 = vpack.c.b16 %v2123, %v2122
        %v2135 = vpack.c.b16 %v2125, %v2124
        %v2136 = vpack.c.b16 %v2127, %v2126
        %v2137 = vpack.c.b16 %v2129, %v2128
        %2146 = vmatprep.subr.bf16.mxu0 0
        %2147 = vmatpush1.bf16.msra.mxu0 %v2137
        %2148 = vmatprep.subr.bf16.mxu0 0
        %2149 = vmatpush1.bf16.msra.mxu0 %v2136
        %2150 = vmatprep.subr.bf16.mxu0 0
        %2151 = vmatpush1.bf16.msra.mxu0 %v2135
        %2152 = vmatprep.subr.bf16.mxu0 0
        %2153 = vmatpush1.bf16.msra.mxu0 %v2134
        %2154 = vmatprep.subr.bf16.mxu0 0
        %2155 = vmatpush1.bf16.msra.mxu0 %v2133
        %2156 = vmatprep.subr.bf16.mxu0 0
        %2157 = vmatpush1.bf16.msra.mxu0 %v2132
        %2158 = vmatprep.subr.bf16.mxu0 0
        %2159 = vmatpush1.bf16.msra.mxu0 %v2131
        %2160 = vmatprep.subr.bf16.mxu0 0
        %2161 = vmatpush1.bf16.msra.mxu0 %v2130
        %2162 = vmatprep.subr.bf16.mxu0 0
        %2163 = vmatpush2.bf16.msra.mxu0 0
        %2164 = vmatprep.subr.bf16.mxu0 0
        %2165 = vmatpush2.bf16.msra.mxu0 0
        %2166 = vmatprep.subr.bf16.mxu0 0
        %2167 = vmatpush2.bf16.msra.mxu0 0
        %2168 = vmatprep.subr.bf16.mxu0 0
        %2169 = vmatpush2.bf16.msra.mxu0 0
        %2170 = vmatprep.subr.bf16.mxu0 0
        %2171 = vmatpush2.bf16.msra.mxu0 0
        %2172 = vmatprep.subr.bf16.mxu0 0
        %2173 = vmatpush2.bf16.msra.mxu0 0
        %2174 = vmatprep.subr.bf16.mxu0 0
        %2175 = vmatpush2.bf16.msra.mxu0 0
        %2176 = vmatprep.subr.bf16.mxu0 0
        %2177 = vmatpush2.bf16.msra.mxu0 0
        %2178 = vmatprep.mubr.bf16.mxu0 0
        %2179 = vmatmul.mubr.bf16.gmra.mxu0 %v2067
        %v2180 = vpop.f32.mrf.mxu0
        %v2181 = vadd.f32 %v2096, %v2180
        %v2182 = vpop.f32.mrf.mxu0
        %v2183 = vpop.f32.mrf.mxu0
        %v2184 = vadd.f32 %v2096, %v2183
        %v2185 = vpop.f32.mrf.mxu0
        %2186 = vmatprep.mubr.bf16.mxu0 0
        %2187 = vmatmul.mubr.bf16.gmra.mxu0 %v2068
        %v2188 = vpop.f32.mrf.mxu0
        %v2189 = vadd.f32 %v2096, %v2188
        %v2190 = vpop.f32.mrf.mxu0
        %v2191 = vpop.f32.mrf.mxu0
        %v2192 = vadd.f32 %v2096, %v2191
        %v2193 = vpop.f32.mrf.mxu0
        %2194 = vmatprep.mubr.bf16.mxu0 0
        %2195 = vmatmul.mubr.bf16.gmra.mxu0 %v2069
        %v2196 = vpop.f32.mrf.mxu0
        %v2197 = vadd.f32 %v2096, %v2196
        %v2198 = vpop.f32.mrf.mxu0
        %v2199 = vpop.f32.mrf.mxu0
        %v2200 = vadd.f32 %v2096, %v2199
        %v2201 = vpop.f32.mrf.mxu0
        %2202 = vmatprep.mubr.bf16.mxu0 0
        %2203 = vmatmul.mubr.bf16.gmra.mxu0 %v2070
        %v2204 = vpop.f32.mrf.mxu0
        %v2205 = vadd.f32 %v2096, %v2204
        %v2206 = vpop.f32.mrf.mxu0
        %v2207 = vpop.f32.mrf.mxu0
        %v2208 = vadd.f32 %v2096, %v2207
        %v2209 = vpop.f32.mrf.mxu0
        %2210 = vmatprep.mubr.bf16.mxu0 0
        %2211 = vmatmul.mubr.bf16.gmra.mxu0 %v2071
        %v2212 = vpop.f32.mrf.mxu0
        %v2213 = vadd.f32 %v2096, %v2212
        %v2214 = vpop.f32.mrf.mxu0
        %v2215 = vpop.f32.mrf.mxu0
        %v2216 = vadd.f32 %v2096, %v2215
        %v2217 = vpop.f32.mrf.mxu0
        %2218 = vmatprep.mubr.bf16.mxu0 0
        %2219 = vmatmul.mubr.bf16.gmra.mxu0 %v2072
        %v2220 = vpop.f32.mrf.mxu0
        %v2221 = vadd.f32 %v2096, %v2220
        %v2222 = vpop.f32.mrf.mxu0
        %v2223 = vpop.f32.mrf.mxu0
        %v2224 = vadd.f32 %v2096, %v2223
        %v2225 = vpop.f32.mrf.mxu0
        %2226 = vmatprep.mubr.bf16.mxu0 0
        %2227 = vmatmul.mubr.bf16.gmra.mxu0 %v2073
        %v2228 = vpop.f32.mrf.mxu0
        %v2229 = vadd.f32 %v2096, %v2228
        %v2230 = vpop.f32.mrf.mxu0
        %v2231 = vpop.f32.mrf.mxu0
        %v2232 = vadd.f32 %v2096, %v2231
        %v2233 = vpop.f32.mrf.mxu0
        %2234 = vmatprep.mubr.bf16.mxu0 0
        %2235 = vmatmul.mubr.bf16.gmra.mxu0 %v2074
        %v2236 = vpop.f32.mrf.mxu0
        %v2237 = vadd.f32 %v2096, %v2236
        %v2238 = vpop.f32.mrf.mxu0
        %v2239 = vpop.f32.mrf.mxu0
        %v2240 = vadd.f32 %v2096, %v2239
        %v2241 = vpop.f32.mrf.mxu0
        %2242 = vdwg.mxu0
        %v2243 = vtanh.pop %v2181
        %v2244 = vtanh.pop %v2184
        %v2245 = vtanh.pop %v2189
        %v2246 = vtanh.pop %v2192
        %v2247 = vtanh.pop %v2197
        %v2248 = vtanh.pop %v2200
        %v2249 = vtanh.pop %v2205
        %v2250 = vtanh.pop %v2208
        %v2251 = vtanh.pop %v2213
        %v2252 = vtanh.pop %v2216
        %v2253 = vtanh.pop %v2221
        %v2254 = vtanh.pop %v2224
        %v2255 = vtanh.pop %v2229
        %v2256 = vtanh.pop %v2232
        %v2257 = vtanh.pop %v2237
        %v2258 = vtanh.pop %v2240
        %v2259 = vrot.slane %v2243, 4
        %v2260 = vmax.f32 %v2243, %v2259
        %v2261 = vrot.slane %v2260, 2
        %v2262 = vmax.f32 %v2260, %v2261
        %v2263 = vrot.slane %v2262, 1
        %v2264 = vmax.f32 %v2262, %v2263
        %v2265 = vrot.slane %v2244, 4
        %v2266 = vmax.f32 %v2244, %v2265
        %v2267 = vrot.slane %v2266, 2
        %v2268 = vmax.f32 %v2266, %v2267
        %v2269 = vrot.slane %v2268, 1
        %v2270 = vmax.f32 %v2268, %v2269
        %v2271 = vrot.slane %v2245, 4
        %v2272 = vmax.f32 %v2245, %v2271
        %v2273 = vrot.slane %v2272, 2
        %v2274 = vmax.f32 %v2272, %v2273
        %v2275 = vrot.slane %v2274, 1
        %v2276 = vmax.f32 %v2274, %v2275
        %v2277 = vrot.slane %v2246, 4
        %v2278 = vmax.f32 %v2246, %v2277
        %v2279 = vrot.slane %v2278, 2
        %v2280 = vmax.f32 %v2278, %v2279
        %v2281 = vrot.slane %v2280, 1
        %v2282 = vmax.f32 %v2280, %v2281
        %v2283 = vrot.slane %v2247, 4
        %v2284 = vmax.f32 %v2247, %v2283
        %v2285 = vrot.slane %v2284, 2
        %v2286 = vmax.f32 %v2284, %v2285
        %v2287 = vrot.slane %v2286, 1
        %v2288 = vmax.f32 %v2286, %v2287
        %v2289 = vrot.slane %v2248, 4
        %v2290 = vmax.f32 %v2248, %v2289
        %v2291 = vrot.slane %v2290, 2
        %v2292 = vmax.f32 %v2290, %v2291
        %v2293 = vrot.slane %v2292, 1
        %v2294 = vmax.f32 %v2292, %v2293
        %v2295 = vrot.slane %v2249, 4
        %v2296 = vmax.f32 %v2249, %v2295
        %v2297 = vrot.slane %v2296, 2
        %v2298 = vmax.f32 %v2296, %v2297
        %v2299 = vrot.slane %v2298, 1
        %v2300 = vmax.f32 %v2298, %v2299
        %v2301 = vrot.slane %v2250, 4
        %v2302 = vmax.f32 %v2250, %v2301
        %v2303 = vrot.slane %v2302, 2
        %v2304 = vmax.f32 %v2302, %v2303
        %v2305 = vrot.slane %v2304, 1
        %v2306 = vmax.f32 %v2304, %v2305
        %v2307 = vrot.slane %v2251, 4
        %v2308 = vmax.f32 %v2251, %v2307
        %v2309 = vrot.slane %v2308, 2
        %v2310 = vmax.f32 %v2308, %v2309
        %v2311 = vrot.slane %v2310, 1
        %v2312 = vmax.f32 %v2310, %v2311
        %v2313 = vrot.slane %v2252, 4
        %v2314 = vmax.f32 %v2252, %v2313
        %v2315 = vrot.slane %v2314, 2
        %v2316 = vmax.f32 %v2314, %v2315
        %v2317 = vrot.slane %v2316, 1
        %v2318 = vmax.f32 %v2316, %v2317
        %v2319 = vrot.slane %v2253, 4
        %v2320 = vmax.f32 %v2253, %v2319
        %v2321 = vrot.slane %v2320, 2
        %v2322 = vmax.f32 %v2320, %v2321
        %v2323 = vrot.slane %v2322, 1
        %v2324 = vmax.f32 %v2322, %v2323
        %v2325 = vrot.slane %v2254, 4
        %v2326 = vmax.f32 %v2254, %v2325
        %v2327 = vrot.slane %v2326, 2
        %v2328 = vmax.f32 %v2326, %v2327
        %v2329 = vrot.slane %v2328, 1
        %v2330 = vmax.f32 %v2328, %v2329
        %v2331 = vrot.slane %v2255, 4
        %v2332 = vmax.f32 %v2255, %v2331
        %v2333 = vrot.slane %v2332, 2
        %v2334 = vmax.f32 %v2332, %v2333
        %v2335 = vrot.slane %v2334, 1
        %v2336 = vmax.f32 %v2334, %v2335
        %v2337 = vrot.slane %v2256, 4
        %v2338 = vmax.f32 %v2256, %v2337
        %v2339 = vrot.slane %v2338, 2
        %v2340 = vmax.f32 %v2338, %v2339
        %v2341 = vrot.slane %v2340, 1
        %v2342 = vmax.f32 %v2340, %v2341
        %v2343 = vrot.slane %v2257, 4
        %v2344 = vmax.f32 %v2257, %v2343
        %v2345 = vrot.slane %v2344, 2
        %v2346 = vmax.f32 %v2344, %v2345
        %v2347 = vrot.slane %v2346, 1
        %v2348 = vmax.f32 %v2346, %v2347
        %v2349 = vrot.slane %v2258, 4
        %v2350 = vmax.f32 %v2258, %v2349
        %v2351 = vrot.slane %v2350, 2
        %v2352 = vmax.f32 %v2350, %v2351
        %v2353 = vrot.slane %v2352, 1
        %v2354 = vmax.f32 %v2352, %v2353
        %v2355 = vsub.f32 %v2243, %v2264
        %v2356 = vsub.f32 %v2244, %v2270
        %v2357 = vsub.f32 %v2245, %v2276
        %v2358 = vsub.f32 %v2246, %v2282
        %v2359 = vsub.f32 %v2247, %v2288
        %v2360 = vsub.f32 %v2248, %v2294
        %v2361 = vsub.f32 %v2249, %v2300
        %v2362 = vsub.f32 %v2250, %v2306
        %v2363 = vsub.f32 %v2251, %v2312
        %v2364 = vsub.f32 %v2252, %v2318
        %v2365 = vsub.f32 %v2253, %v2324
        %v2366 = vsub.f32 %v2254, %v2330
        %v2367 = vsub.f32 %v2255, %v2336
        %v2368 = vsub.f32 %v2256, %v2342
        %v2369 = vsub.f32 %v2257, %v2348
        %v2370 = vsub.f32 %v2258, %v2354
        %v2371 = vmul.f32 %v2355, 1.442695
        %v2372 = vpow.pop %v2371
        %v2373 = vmul.f32 %v2356, 1.442695
        %v2374 = vpow.pop %v2373
        %v2375 = vmul.f32 %v2357, 1.442695
        %v2376 = vpow.pop %v2375
        %v2377 = vmul.f32 %v2358, 1.442695
        %v2378 = vpow.pop %v2377
        %v2379 = vmul.f32 %v2359, 1.442695
        %v2380 = vpow.pop %v2379
        %v2381 = vmul.f32 %v2360, 1.442695
        %v2382 = vpow.pop %v2381
        %v2383 = vmul.f32 %v2361, 1.442695
        %v2384 = vpow.pop %v2383
        %v2385 = vmul.f32 %v2362, 1.442695
        %v2386 = vpow.pop %v2385
        %v2387 = vmul.f32 %v2363, 1.442695
        %v2388 = vpow.pop %v2387
        %v2389 = vmul.f32 %v2364, 1.442695
        %v2390 = vpow.pop %v2389
        %v2391 = vmul.f32 %v2365, 1.442695
        %v2392 = vpow.pop %v2391
        %v2393 = vmul.f32 %v2366, 1.442695
        %v2394 = vpow.pop %v2393
        %v2395 = vmul.f32 %v2367, 1.442695
        %v2396 = vpow.pop %v2395
        %v2397 = vmul.f32 %v2368, 1.442695
        %v2398 = vpow.pop %v2397
        %v2399 = vmul.f32 %v2369, 1.442695
        %v2400 = vpow.pop %v2399
        %v2401 = vmul.f32 %v2370, 1.442695
        %v2402 = vpow.pop %v2401
        %v2403 = vrot.slane %v2372, 4
        %v2404 = vadd.f32 %v2372, %v2403
        %v2405 = vrot.slane %v2404, 2
        %v2406 = vadd.f32 %v2404, %v2405
        %v2407 = vrot.slane %v2406, 1
        %v2408 = vadd.f32 %v2406, %v2407
        %v2409 = vrot.slane %v2374, 4
        %v2410 = vadd.f32 %v2374, %v2409
        %v2411 = vrot.slane %v2410, 2
        %v2412 = vadd.f32 %v2410, %v2411
        %v2413 = vrot.slane %v2412, 1
        %v2414 = vadd.f32 %v2412, %v2413
        %v2415 = vrot.slane %v2376, 4
        %v2416 = vadd.f32 %v2376, %v2415
        %v2417 = vrot.slane %v2416, 2
        %v2418 = vadd.f32 %v2416, %v2417
        %v2419 = vrot.slane %v2418, 1
        %v2420 = vadd.f32 %v2418, %v2419
        %v2421 = vrot.slane %v2378, 4
        %v2422 = vadd.f32 %v2378, %v2421
        %v2423 = vrot.slane %v2422, 2
        %v2424 = vadd.f32 %v2422, %v2423
        %v2425 = vrot.slane %v2424, 1
        %v2426 = vadd.f32 %v2424, %v2425
        %v2427 = vrot.slane %v2380, 4
        %v2428 = vadd.f32 %v2380, %v2427
        %v2429 = vrot.slane %v2428, 2
        %v2430 = vadd.f32 %v2428, %v2429
        %v2431 = vrot.slane %v2430, 1
        %v2432 = vadd.f32 %v2430, %v2431
        %v2433 = vrot.slane %v2382, 4
        %v2434 = vadd.f32 %v2382, %v2433
        %v2435 = vrot.slane %v2434, 2
        %v2436 = vadd.f32 %v2434, %v2435
        %v2437 = vrot.slane %v2436, 1
        %v2438 = vadd.f32 %v2436, %v2437
        %v2439 = vrot.slane %v2384, 4
        %v2440 = vadd.f32 %v2384, %v2439
        %v2441 = vrot.slane %v2440, 2
        %v2442 = vadd.f32 %v2440, %v2441
        %v2443 = vrot.slane %v2442, 1
        %v2444 = vadd.f32 %v2442, %v2443
        %v2445 = vrot.slane %v2386, 4
        %v2446 = vadd.f32 %v2386, %v2445
        %v2447 = vrot.slane %v2446, 2
        %v2448 = vadd.f32 %v2446, %v2447
        %v2449 = vrot.slane %v2448, 1
        %v2450 = vadd.f32 %v2448, %v2449
        %v2451 = vrot.slane %v2388, 4
        %v2452 = vadd.f32 %v2388, %v2451
        %v2453 = vrot.slane %v2452, 2
        %v2454 = vadd.f32 %v2452, %v2453
        %v2455 = vrot.slane %v2454, 1
        %v2456 = vadd.f32 %v2454, %v2455
        %v2457 = vrot.slane %v2390, 4
        %v2458 = vadd.f32 %v2390, %v2457
        %v2459 = vrot.slane %v2458, 2
        %v2460 = vadd.f32 %v2458, %v2459
        %v2461 = vrot.slane %v2460, 1
        %v2462 = vadd.f32 %v2460, %v2461
        %v2463 = vrot.slane %v2392, 4
        %v2464 = vadd.f32 %v2392, %v2463
        %v2465 = vrot.slane %v2464, 2
        %v2466 = vadd.f32 %v2464, %v2465
        %v2467 = vrot.slane %v2466, 1
        %v2468 = vadd.f32 %v2466, %v2467
        %v2469 = vrot.slane %v2394, 4
        %v2470 = vadd.f32 %v2394, %v2469
        %v2471 = vrot.slane %v2470, 2
        %v2472 = vadd.f32 %v2470, %v2471
        %v2473 = vrot.slane %v2472, 1
        %v2474 = vadd.f32 %v2472, %v2473
        %v2475 = vrot.slane %v2396, 4
        %v2476 = vadd.f32 %v2396, %v2475
        %v2477 = vrot.slane %v2476, 2
        %v2478 = vadd.f32 %v2476, %v2477
        %v2479 = vrot.slane %v2478, 1
        %v2480 = vadd.f32 %v2478, %v2479
        %v2481 = vrot.slane %v2398, 4
        %v2482 = vadd.f32 %v2398, %v2481
        %v2483 = vrot.slane %v2482, 2
        %v2484 = vadd.f32 %v2482, %v2483
        %v2485 = vrot.slane %v2484, 1
        %v2486 = vadd.f32 %v2484, %v2485
        %v2487 = vrot.slane %v2400, 4
        %v2488 = vadd.f32 %v2400, %v2487
        %v2489 = vrot.slane %v2488, 2
        %v2490 = vadd.f32 %v2488, %v2489
        %v2491 = vrot.slane %v2490, 1
        %v2492 = vadd.f32 %v2490, %v2491
        %v2493 = vrot.slane %v2402, 4
        %v2494 = vadd.f32 %v2402, %v2493
        %v2495 = vrot.slane %v2494, 2
        %v2496 = vadd.f32 %v2494, %v2495
        %v2497 = vrot.slane %v2496, 1
        %v2498 = vadd.f32 %v2496, %v2497
        %v2499 = vrcp.pop %v2408
        %v2500 = vmul.f32 %v2372, %v2499
        %v2501 = vrcp.pop %v2414
        %v2502 = vmul.f32 %v2374, %v2501
        %v2503 = vrcp.pop %v2420
        %v2504 = vmul.f32 %v2376, %v2503
        %v2505 = vrcp.pop %v2426
        %v2506 = vmul.f32 %v2378, %v2505
        %v2507 = vrcp.pop %v2432
        %v2508 = vmul.f32 %v2380, %v2507
        %v2509 = vrcp.pop %v2438
        %v2510 = vmul.f32 %v2382, %v2509
        %v2511 = vrcp.pop %v2444
        %v2512 = vmul.f32 %v2384, %v2511
        %v2513 = vrcp.pop %v2450
        %v2514 = vmul.f32 %v2386, %v2513
        %v2515 = vrcp.pop %v2456
        %v2516 = vmul.f32 %v2388, %v2515
        %v2517 = vrcp.pop %v2462
        %v2518 = vmul.f32 %v2390, %v2517
        %v2519 = vrcp.pop %v2468
        %v2520 = vmul.f32 %v2392, %v2519
        %v2521 = vrcp.pop %v2474
        %v2522 = vmul.f32 %v2394, %v2521
        %v2523 = vrcp.pop %v2480
        %v2524 = vmul.f32 %v2396, %v2523
        %v2525 = vrcp.pop %v2486
        %v2526 = vmul.f32 %v2398, %v2525
        %v2527 = vrcp.pop %v2492
        %v2528 = vmul.f32 %v2400, %v2527
        %v2529 = vrcp.pop %v2498
        %v2530 = vmul.f32 %v2402, %v2529
        %2531 = vrot.lane.b32.xlu0 %v2181, 64
        %v2532 = vpop.permute.xlu0 %2531
        %2533 = vrot.lane.b32.xlu0 %v2184, 64
        %v2534 = vpop.permute.xlu0 %2533
        %2535 = vrot.lane.b32.xlu0 %v2189, 64
        %v2536 = vpop.permute.xlu0 %2535
        %2537 = vrot.lane.b32.xlu0 %v2192, 64
        %v2538 = vpop.permute.xlu0 %2537
        %2539 = vrot.lane.b32.xlu0 %v2197, 64
        %v2540 = vpop.permute.xlu0 %2539
        %2541 = vrot.lane.b32.xlu0 %v2200, 64
        %v2542 = vpop.permute.xlu0 %2541
        %2543 = vrot.lane.b32.xlu0 %v2205, 64
        %v2544 = vpop.permute.xlu0 %2543
        %2545 = vrot.lane.b32.xlu0 %v2208, 64
        %v2546 = vpop.permute.xlu0 %2545
        %2547 = vrot.lane.b32.xlu0 %v2213, 64
        %v2548 = vpop.permute.xlu0 %2547
        %2549 = vrot.lane.b32.xlu0 %v2216, 64
        %v2550 = vpop.permute.xlu0 %2549
        %2551 = vrot.lane.b32.xlu0 %v2221, 64
        %v2552 = vpop.permute.xlu0 %2551
        %2553 = vrot.lane.b32.xlu0 %v2224, 64
        %v2554 = vpop.permute.xlu0 %2553
        %2555 = vrot.lane.b32.xlu0 %v2229, 64
        %v2556 = vpop.permute.xlu0 %2555
        %2557 = vrot.lane.b32.xlu0 %v2232, 64
        %v2558 = vpop.permute.xlu0 %2557
        %2559 = vrot.lane.b32.xlu0 %v2237, 64
        %v2560 = vpop.permute.xlu0 %2559
        %2561 = vrot.lane.b32.xlu0 %v2240, 64
        %v2562 = vpop.permute.xlu0 %2561
        %v2563 = vmul.f32 %v2500, %v2532
        %v2564 = vmul.f32 %v2502, %v2534
        %v2565 = vmul.f32 %v2504, %v2536
        %v2566 = vmul.f32 %v2506, %v2538
        %v2567 = vmul.f32 %v2508, %v2540
        %v2568 = vmul.f32 %v2510, %v2542
        %v2569 = vmul.f32 %v2512, %v2544
        %v2570 = vmul.f32 %v2514, %v2546
        %v2571 = vmul.f32 %v2516, %v2548
        %v2572 = vmul.f32 %v2518, %v2550
        %v2573 = vmul.f32 %v2520, %v2552
        %v2574 = vmul.f32 %v2522, %v2554
        %v2575 = vmul.f32 %v2524, %v2556
        %v2576 = vmul.f32 %v2526, %v2558
        %v2577 = vmul.f32 %v2528, %v2560
        %v2578 = vmul.f32 %v2530, %v2562
        %v2579 = vrot.slane %v2563, 4
        %v2580 = vadd.f32 %v2563, %v2579
        %v2581 = vrot.slane %v2580, 2
        %v2582 = vadd.f32 %v2580, %v2581
        %v2583 = vrot.slane %v2582, 1
        %v2584 = vadd.f32 %v2582, %v2583
        %v2585 = vrot.slane %v2564, 4
        %v2586 = vadd.f32 %v2564, %v2585
        %v2587 = vrot.slane %v2586, 2
        %v2588 = vadd.f32 %v2586, %v2587
        %v2589 = vrot.slane %v2588, 1
        %v2590 = vadd.f32 %v2588, %v2589
        %v2591 = vrot.slane %v2565, 4
        %v2592 = vadd.f32 %v2565, %v2591
        %v2593 = vrot.slane %v2592, 2
        %v2594 = vadd.f32 %v2592, %v2593
        %v2595 = vrot.slane %v2594, 1
        %v2596 = vadd.f32 %v2594, %v2595
        %v2597 = vrot.slane %v2566, 4
        %v2598 = vadd.f32 %v2566, %v2597
        %v2599 = vrot.slane %v2598, 2
        %v2600 = vadd.f32 %v2598, %v2599
        %v2601 = vrot.slane %v2600, 1
        %v2602 = vadd.f32 %v2600, %v2601
        %v2603 = vrot.slane %v2567, 4
        %v2604 = vadd.f32 %v2567, %v2603
        %v2605 = vrot.slane %v2604, 2
        %v2606 = vadd.f32 %v2604, %v2605
        %v2607 = vrot.slane %v2606, 1
        %v2608 = vadd.f32 %v2606, %v2607
        %v2609 = vrot.slane %v2568, 4
        %v2610 = vadd.f32 %v2568, %v2609
        %v2611 = vrot.slane %v2610, 2
        %v2612 = vadd.f32 %v2610, %v2611
        %v2613 = vrot.slane %v2612, 1
        %v2614 = vadd.f32 %v2612, %v2613
        %v2615 = vrot.slane %v2569, 4
        %v2616 = vadd.f32 %v2569, %v2615
        %v2617 = vrot.slane %v2616, 2
        %v2618 = vadd.f32 %v2616, %v2617
        %v2619 = vrot.slane %v2618, 1
        %v2620 = vadd.f32 %v2618, %v2619
        %v2621 = vrot.slane %v2570, 4
        %v2622 = vadd.f32 %v2570, %v2621
        %v2623 = vrot.slane %v2622, 2
        %v2624 = vadd.f32 %v2622, %v2623
        %v2625 = vrot.slane %v2624, 1
        %v2626 = vadd.f32 %v2624, %v2625
        %v2627 = vrot.slane %v2571, 4
        %v2628 = vadd.f32 %v2571, %v2627
        %v2629 = vrot.slane %v2628, 2
        %v2630 = vadd.f32 %v2628, %v2629
        %v2631 = vrot.slane %v2630, 1
        %v2632 = vadd.f32 %v2630, %v2631
        %v2633 = vrot.slane %v2572, 4
        %v2634 = vadd.f32 %v2572, %v2633
        %v2635 = vrot.slane %v2634, 2
        %v2636 = vadd.f32 %v2634, %v2635
        %v2637 = vrot.slane %v2636, 1
        %v2638 = vadd.f32 %v2636, %v2637
        %v2639 = vrot.slane %v2573, 4
        %v2640 = vadd.f32 %v2573, %v2639
        %v2641 = vrot.slane %v2640, 2
        %v2642 = vadd.f32 %v2640, %v2641
        %v2643 = vrot.slane %v2642, 1
        %v2644 = vadd.f32 %v2642, %v2643
        %v2645 = vrot.slane %v2574, 4
        %v2646 = vadd.f32 %v2574, %v2645
        %v2647 = vrot.slane %v2646, 2
        %v2648 = vadd.f32 %v2646, %v2647
        %v2649 = vrot.slane %v2648, 1
        %v2650 = vadd.f32 %v2648, %v2649
        %v2651 = vrot.slane %v2575, 4
        %v2652 = vadd.f32 %v2575, %v2651
        %v2653 = vrot.slane %v2652, 2
        %v2654 = vadd.f32 %v2652, %v2653
        %v2655 = vrot.slane %v2654, 1
        %v2656 = vadd.f32 %v2654, %v2655
        %v2657 = vrot.slane %v2576, 4
        %v2658 = vadd.f32 %v2576, %v2657
        %v2659 = vrot.slane %v2658, 2
        %v2660 = vadd.f32 %v2658, %v2659
        %v2661 = vrot.slane %v2660, 1
        %v2662 = vadd.f32 %v2660, %v2661
        %v2663 = vrot.slane %v2577, 4
        %v2664 = vadd.f32 %v2577, %v2663
        %v2665 = vrot.slane %v2664, 2
        %v2666 = vadd.f32 %v2664, %v2665
        %v2667 = vrot.slane %v2666, 1
        %v2668 = vadd.f32 %v2666, %v2667
        %v2669 = vrot.slane %v2578, 4
        %v2670 = vadd.f32 %v2578, %v2669
        %v2671 = vrot.slane %v2670, 2
        %v2672 = vadd.f32 %v2670, %v2671
        %v2673 = vrot.slane %v2672, 1
        %v2674 = vadd.f32 %v2672, %v2673
        %vm2691 = vcmask 1041409
        %v2692 = vsel %vm2691, %v2590, %v2584
        %vm2693 = vcmask 1042434
        %v2694 = vsel %vm2693, %v2596, %v2692
        %vm2695 = vcmask 1043459
        %v2696 = vsel %vm2695, %v2602, %v2694
        %vm2697 = vcmask 1044484
        %v2698 = vsel %vm2697, %v2608, %v2696
        %vm2699 = vcmask 1045509
        %v2700 = vsel %vm2699, %v2614, %v2698
        %vm2701 = vcmask 1046534
        %v2702 = vsel %vm2701, %v2620, %v2700
        %vm2703 = vcmask 1047559
        %v2704 = vsel %vm2703, %v2626, %v2702
        %v2705 = vsel %vm2691, %v2638, %v2632
        %v2706 = vsel %vm2693, %v2644, %v2705
        %v2707 = vsel %vm2695, %v2650, %v2706
        %v2708 = vsel %vm2697, %v2656, %v2707
        %v2709 = vsel %vm2699, %v2662, %v2708
        %v2710 = vsel %vm2701, %v2668, %v2709
        %v2711 = vsel %vm2703, %v2674, %v2710
        %2714 = vst [vmem:[%s297] sm:$0xff] %v2704
        %2715 = vst [vmem:[%s297 + $0x8] sm:$0xff] %v2711
        %s2716 = sand.u32 %s142, 1
        %s2717 = scalar_lea.sflag [#allocation5], %s2716
        %s2718 = sand.u32 %s142, 1
        %s2719 = smul.addr %s2718, 16
        %s2720 = scalar_lea.vmem [#allocation12], %s2719
        // Predicated region
        $region61: #{tpu_custom_call.1} parent=39 // pred_check
          %p2721 = pneg %p152
        $region62: #{tpu_custom_call.1} parent=39 // pred_check_branch
          %2723 = sbr.rel (%p2721) target = $region64
        $region63: #{tpu_custom_call.1} parent=39 // pred_region
          %s2724 = smul.u32 2, %s24
          %s2726 = ssub.s32 256, 256
          %2727 = vsyncadd %s2717, %s2726
          %s2728 = smul.addr %s2724, 128
          %s2729 = scalar_lea.hbm %s5, %s2728
          %s2730 = sshll.u32 %s2720, 4
          %s2731 = int_to_ptr.vmem [resolvable:$true] %s2730
          %2736 = dma.vmem_to_hbm [thread:$0]  %s2731, 256, %s2729, %s2717, 128, 128, 8
        $region64: #{tpu_custom_call.1} parent=39 // pred_fallthru
          _
      $region40: #{tpu_custom_call.1} parent=5 // pred_fallthru
        _
      %p2737 = scmp.le.s32.totalorder 2, %s19
      // Predicated region
      $region65: #{tpu_custom_call.1} parent=5 // pred_check
        %p2738 = pneg %p2737
      $region66: #{tpu_custom_call.1} parent=5 // pred_check_branch
        %2740 = sbr.rel (%p2738) target = $region68
      $region67: #{tpu_custom_call.1} parent=5 // pred_region
        %s2741 = ssub.s32 %s19, 2
        // Predicated region
        $region69: #{tpu_custom_call.1} parent=67 // pred_check
          %p2742 = pneg %p158
        $region70: #{tpu_custom_call.1} parent=67 // pred_check_branch
          %2744 = sbr.rel (%p2742) target = $region72
        $region71: #{tpu_custom_call.1} parent=67 // pred_region
          %s2745 = sand.u32 %s143, 1
          %s2746 = scalar_lea.sflag [#allocation5], %s2745
          %s2747 = sand.u32 %s143, 1
          %s2748 = smul.addr %s2747, 16
          %s2749 = scalar_lea.vmem [#allocation12], %s2748
          %2750 = dma.done %s2746, 256
        $region72: #{tpu_custom_call.1} parent=67 // pred_fallthru
          _
      $region68: #{tpu_custom_call.1} parent=5 // pred_fallthru
        _
    $region6: #{tpu_custom_call.1} parent=1 // loop_footer
      %s23 = sadd.s32 1, %s19
    $region7: #{tpu_custom_call.1} parent=1 // loop_footer_branch
      %18 = sbr.rel target = $region3
    $region8: #{tpu_custom_call.1} parent=1 // loop_exit
      _
    %2751 = vsyncpa [#allocation4], 1
    %s2752 = scalar_lea.sflag [#allocation4], 1
    %2753 = vsyncpa %s2752, 1
    %2754 = vsyncpa [#allocation7], 1
    %2755 = vsyncpa [#allocation10], 1
    %2756 = vsyncpa [#allocation5], 1
    %s2757 = scalar_lea.sflag [#allocation5], 1
    %2758 = vsyncpa %s2757, 1

</llo_original>
